<compile_context>
chip_gen: v7x
topology: tpu7x:2x2x1
jax: 0.10.0
libtpu: 0.0.40
codegen_flags: <defaults>
</compile_context>

<pallas_src>
import math

import jax
import jax.numpy as jnp
import numpy as np
from jax import lax
from jax.experimental import pallas as pl
from jax.experimental.pallas import tpu as pltpu

CANN_HEADS = 4
LSTM_H_DIM = 128


def _cann_kernel(x_ref, wq_ref, wk_ref, wv_ref, bq_ref, bk_ref, bv_ref,
                 wo_ref, bo_ref, ws_ref, bs_ref,
                 scores_ref, attnw_ref,
                 *, num_heads):
    """One grid step == B_tile batch elements.

    x_ref      : (B, L, E)    input tokens for this batch tile
    wq/wk/wv   : (E, E)       in-projection weights, pre-transposed (x @ W)
    bq/bk/bv   : (1, E)       in-projection biases
    wo_ref     : (E, E)       out-projection weight, pre-transposed
    bo_ref     : (1, E)       out-projection bias
    ws_ref     : (1, E)       score linear weight (row)
    bs_ref     : (1, 1)       score linear bias
    scores_ref : (B, L)       sigmoid(Linear(attn_out))   (lane-dense slab)
    attnw_ref  : (B, L*L)     head-averaged attn weights  (lane-dense slab)
    """
    x = x_ref[...].astype(jnp.float32)          # (B, L, E)
    B, L, E = x.shape
    dh = E // num_heads
    scale = 1.0 / math.sqrt(dh)

    xf = x.reshape(B * L, E)                    # fill MXU M dim with B*L rows

    # in-projection: one big matmul each on the (B*L, E) slab
    q = jnp.dot(xf, wq_ref[...], preferred_element_type=jnp.float32) + bq_ref[...]
    q = q * scale                               # scale once on the full slab
    k = jnp.dot(xf, wk_ref[...], preferred_element_type=jnp.float32) + bk_ref[...]
    v = jnp.dot(xf, wv_ref[...], preferred_element_type=jnp.float32) + bv_ref[...]

    attn_acc = jnp.zeros((B, L, L), dtype=jnp.float32)
    out_acc = jnp.zeros((B * L, E), dtype=jnp.float32)

    # batched matmul dim-numbers (no explicit transposes)
    dn_qk = (((2,), (2,)), ((0,), (0,)))        # contract dh, batch over B
    dn_pv = (((2,), (1,)), ((0,), (0,)))        # contract L_k, batch over B

    for h in range(num_heads):                  # static unrolled head loop
        lo = h * dh
        qh = q[:, lo:lo + dh].reshape(B, L, dh)
        kh = k[:, lo:lo + dh].reshape(B, L, dh)
        vh = v[:, lo:lo + dh].reshape(B, L, dh)

        s = lax.dot_general(qh, kh, dn_qk,
                            preferred_element_type=jnp.float32)     # (B, L, L)
        s = s - jnp.max(s, axis=-1, keepdims=True)
        e = jnp.exp(s)
        p = e / jnp.sum(e, axis=-1, keepdims=True)                  # softmax
        attn_acc = attn_acc + p

        ctx_h = lax.dot_general(p, vh, dn_pv,
                                preferred_element_type=jnp.float32)  # (B, L, dh)
        # accumulate out-projection per head (avoids lane-axis concatenate)
        out_acc = out_acc + jnp.dot(ctx_h.reshape(B * L, dh),
                                    wo_ref[lo:lo + dh, :],
                                    preferred_element_type=jnp.float32)

    out = out_acc + bo_ref[...]                 # (B*L, E)

    # score head: Linear(E, 1) + Sigmoid as VPU multiply + lane reduce
    logits = jnp.sum(out * ws_ref[...], axis=-1, keepdims=True) + bs_ref[...]
    scores_ref[...] = jax.nn.sigmoid(logits).reshape(B, L)
    attnw_ref[...] = (attn_acc * (1.0 / num_heads)).reshape(B, L * L)


def _pick_batch_tile(n, seq_len, target_rows=256):
    """Largest divisor of n with b*seq_len <= target_rows (MXU M-dim fill)."""
    b = max(1, min(n, target_rows // max(1, seq_len)))
    while n % b != 0:
        b -= 1
    return b


def basic_cann_forward(x_lne, params, *, num_heads=CANN_HEADS):
    """x_lne: (L, N, E) float32, PyTorch MultiheadAttention convention.

    Returns (scores, attn_weights) with shapes (L, N, 1) and (N, L, L),
    matching the PyTorch module.
    """
    L, N, E = x_lne.shape
    assert E % num_heads == 0

    in_proj_w = params["in_proj_weight"]        # (3E, E)
    in_proj_b = params["in_proj_bias"]          # (3E,)
    wq_t = in_proj_w[0 * E:1 * E].T             # (E, E), pre-transposed: x @ W
    wk_t = in_proj_w[1 * E:2 * E].T
    wv_t = in_proj_w[2 * E:3 * E].T
    bq = in_proj_b[0 * E:1 * E].reshape(1, E)
    bk = in_proj_b[1 * E:2 * E].reshape(1, E)
    bv = in_proj_b[2 * E:3 * E].reshape(1, E)
    wo_t = params["out_proj_weight"].T          # (E, E)
    bo = params["out_proj_bias"].reshape(1, E)
    ws = params["score_weight"].reshape(1, E)   # row form for VPU mul + reduce
    bs = params["score_bias"].reshape(1, 1)

    x_nle = jnp.transpose(x_lne, (1, 0, 2))     # (N, L, E)

    B_tile = _pick_batch_tile(N, L)             # e.g. B_tile*L ~= 256 rows
    grid = (N // B_tile,)

    w2 = lambda b: (0, 0)                       # weights: constant across grid
    weight_specs = [
        pl.BlockSpec((E, E), w2),   # wq_t
        pl.BlockSpec((E, E), w2),   # wk_t
        pl.BlockSpec((E, E), w2),   # wv_t
        pl.BlockSpec((1, E), w2),   # bq
        pl.BlockSpec((1, E), w2),   # bk
        pl.BlockSpec((1, E), w2),   # bv
        pl.BlockSpec((E, E), w2),   # wo_t
        pl.BlockSpec((1, E), w2),   # bo
        pl.BlockSpec((1, E), w2),   # ws
        pl.BlockSpec((1, 1), w2),   # bs
    ]

    kernel = lambda *refs: _cann_kernel(*refs, num_heads=num_heads)

    scores_nl, attnw_flat = pl.pallas_call(
        kernel,
        out_shape=(
            jax.ShapeDtypeStruct((N, L), jnp.float32),
            jax.ShapeDtypeStruct((N, L * L), jnp.float32),
        ),
        grid_spec=pltpu.PrefetchScalarGridSpec(
            num_scalar_prefetch=0,
            grid=grid,
            in_specs=[pl.BlockSpec((B_tile, L, E), lambda b: (b, 0, 0))]
                     + weight_specs,
            out_specs=[
                pl.BlockSpec((B_tile, L), lambda b: (b, 0)),
                pl.BlockSpec((B_tile, L * L), lambda b: (b, 0)),
            ],
        ),
        compiler_params=pltpu.CompilerParams(
            dimension_semantics=("parallel",)),
    )(x_nle, wq_t, wk_t, wv_t, bq, bk, bv, wo_t, bo, ws, bs)

    scores_ln1 = jnp.transpose(scores_nl, (1, 0)).reshape(L, N, 1)
    attnw_nll = attnw_flat.reshape(N, L, L)
    return scores_ln1, attnw_nll


def _ref_forward(x_lne, params, *, num_heads=CANN_HEADS):
    """Pure-JAX reference mirroring nn.MultiheadAttention forward."""
    L, N, E = x_lne.shape
    dh = E // num_heads
    x = jnp.transpose(x_lne, (1, 0, 2))                         # (N, L, E)
    in_w, in_b = params["in_proj_weight"], params["in_proj_bias"]
    q = x @ in_w[0 * E:1 * E].T + in_b[0 * E:1 * E]
    k = x @ in_w[1 * E:2 * E].T + in_b[1 * E:2 * E]
    v = x @ in_w[2 * E:3 * E].T + in_b[2 * E:3 * E]
    qh = q.reshape(N, L, num_heads, dh).transpose(0, 2, 1, 3)   # (N,H,L,dh)
    kh = k.reshape(N, L, num_heads, dh).transpose(0, 2, 1, 3)
    vh = v.reshape(N, L, num_heads, dh).transpose(0, 2, 1, 3)
    s = jnp.einsum("nhld,nhmd->nhlm", qh, kh) / math.sqrt(dh)
    p = jax.nn.softmax(s, axis=-1)
    ctx = jnp.einsum("nhlm,nhmd->nhld", p, vh)
    ctx = ctx.transpose(0, 2, 1, 3).reshape(N, L, E)
    out = ctx @ params["out_proj_weight"].T + params["out_proj_bias"]
    scores = jax.nn.sigmoid(out @ params["score_weight"].T + params["score_bias"])
    return jnp.transpose(scores, (1, 0, 2)), p.mean(axis=1)


def _init_params(key, embed_dim=LSTM_H_DIM):
    E = embed_dim
    k1, k2, k3, k4, k5, k6 = jax.random.split(key, 6)
    lim_in = math.sqrt(6.0 / (E + E))                 # xavier-uniform-ish
    return {
        "in_proj_weight": jax.random.uniform(k1, (3 * E, E), jnp.float32, -lim_in, lim_in),
        "in_proj_bias": jax.random.uniform(k2, (3 * E,), jnp.float32, -0.1, 0.1),
        "out_proj_weight": jax.random.uniform(k3, (E, E), jnp.float32, -lim_in, lim_in),
        "out_proj_bias": jax.random.uniform(k4, (E,), jnp.float32, -0.1, 0.1),
        "score_weight": jax.random.uniform(k5, (1, E), jnp.float32, -1.0 / math.sqrt(E), 1.0 / math.sqrt(E)),
        "score_bias": jax.random.uniform(k6, (1,), jnp.float32, -0.1, 0.1),
    }


if __name__ == "__main__":
    L, N, E = 8, 2, LSTM_H_DIM          # (seq, batch, embed) per PyTorch MHA default
    key = jax.random.PRNGKey(0)
    kx, kp = jax.random.split(key)
    x = jax.random.normal(kx, (L, N, E), dtype=jnp.float32)
    params = _init_params(kp, E)

    scores, attn_w = basic_cann_forward(x, params)
    scores, attn_w = jax.block_until_ready((scores, attn_w))

    ref_scores, ref_attn = _ref_forward(x, params)
    np.testing.assert_allclose(np.asarray(scores), np.asarray(ref_scores), atol=1e-4, rtol=1e-4)
    np.testing.assert_allclose(np.asarray(attn_w), np.asarray(ref_attn), atol=1e-4, rtol=1e-4)

    assert scores.shape == (L, N, 1) and attn_w.shape == (N, L, L)
    print("KERNEL_OK")
</pallas_src>

<mosaic_0001>
module attributes {stable_mosaic.version = 11 : i64} {
  func.func @_lambda_(%arg0: i32, %arg1: memref<2x8x128xf32, #tpu.memory_space<vmem>>, %arg2: memref<128x128xf32, #tpu.memory_space<vmem>>, %arg3: memref<128x128xf32, #tpu.memory_space<vmem>>, %arg4: memref<128x128xf32, #tpu.memory_space<vmem>>, %arg5: memref<1x128xf32, #tpu.memory_space<vmem>>, %arg6: memref<1x128xf32, #tpu.memory_space<vmem>>, %arg7: memref<1x128xf32, #tpu.memory_space<vmem>>, %arg8: memref<128x128xf32, #tpu.memory_space<vmem>>, %arg9: memref<1x128xf32, #tpu.memory_space<vmem>>, %arg10: memref<1x128xf32, #tpu.memory_space<vmem>>, %arg11: memref<1x1xf32, #tpu.memory_space<vmem>>, %arg12: memref<2x8xf32, #tpu.memory_space<vmem>>, %arg13: memref<2x64xf32, #tpu.memory_space<vmem>>) attributes {dimension_semantics = [#tpu.dimension_semantics<parallel>], iteration_bounds = array<i64: 1>, scalar_prefetch = 0 : i64, scratch_operands = 0 : i64, tpu.core_type = #tpu.core_type<tc>, window_params = [{transform_indices = @transform_0, window_bounds = array<i64: 2, 8, 128>}, {pipeline_mode = #tpu.pipeline_mode<synchronous>, transform_indices = @transform_1, window_bounds = array<i64: 128, 128>}, {pipeline_mode = #tpu.pipeline_mode<synchronous>, transform_indices = @transform_2, window_bounds = array<i64: 128, 128>}, {pipeline_mode = #tpu.pipeline_mode<synchronous>, transform_indices = @transform_3, window_bounds = array<i64: 128, 128>}, {pipeline_mode = #tpu.pipeline_mode<synchronous>, transform_indices = @transform_4, window_bounds = array<i64: 1, 128>}, {pipeline_mode = #tpu.pipeline_mode<synchronous>, transform_indices = @transform_5, window_bounds = array<i64: 1, 128>}, {pipeline_mode = #tpu.pipeline_mode<synchronous>, transform_indices = @transform_6, window_bounds = array<i64: 1, 128>}, {pipeline_mode = #tpu.pipeline_mode<synchronous>, transform_indices = @transform_7, window_bounds = array<i64: 128, 128>}, {pipeline_mode = #tpu.pipeline_mode<synchronous>, transform_indices = @transform_8, window_bounds = array<i64: 1, 128>}, {pipeline_mode = #tpu.pipeline_mode<synchronous>, transform_indices = @transform_9, window_bounds = array<i64: 1, 128>}, {pipeline_mode = #tpu.pipeline_mode<synchronous>, transform_indices = @transform_10, window_bounds = array<i64: 1, 1>}, {transform_indices = @transform_11, window_bounds = array<i64: 2, 8>}, {transform_indices = @transform_12, window_bounds = array<i64: 2, 64>}]} {
    %c0 = arith.constant 0 : index
    %c0_0 = arith.constant 0 : index
    %c0_1 = arith.constant 0 : index
    %0 = vector.load %arg1[%c0, %c0_0, %c0_1] : memref<2x8x128xf32, #tpu.memory_space<vmem>>, vector<2x8x128xf32>
    %1 = vector.shape_cast %0 : vector<2x8x128xf32> to vector<16x128xf32>
    %c0_2 = arith.constant 0 : index
    %c0_3 = arith.constant 0 : index
    %2 = vector.load %arg2[%c0_2, %c0_3] : memref<128x128xf32, #tpu.memory_space<vmem>>, vector<128x128xf32>
    %cst = arith.constant dense<0.000000e+00> : vector<16x128xf32>
    %3 = tpu.matmul %1, %2, %cst {dimension_numbers = #tpu.dot_dimension_numbers<[1], [0], [0], [1], [0, 0, 1, 1], [], []>} : vector<16x128xf32>, vector<128x128xf32>, vector<16x128xf32> -> vector<16x128xf32>
    %c0_4 = arith.constant 0 : index
    %c0_5 = arith.constant 0 : index
    %4 = vector.load %arg5[%c0_4, %c0_5] : memref<1x128xf32, #tpu.memory_space<vmem>>, vector<1x128xf32>
    %5 = vector.broadcast %4 : vector<1x128xf32> to vector<16x128xf32>
    %6 = arith.addf %3, %5 : vector<16x128xf32>
    %cst_6 = arith.constant 0.176776692 : f32
    %7 = vector.broadcast %cst_6 : f32 to vector<16x128xf32>
    %8 = arith.mulf %6, %7 : vector<16x128xf32>
    %c0_7 = arith.constant 0 : index
    %c0_8 = arith.constant 0 : index
    %9 = vector.load %arg3[%c0_7, %c0_8] : memref<128x128xf32, #tpu.memory_space<vmem>>, vector<128x128xf32>
    %cst_9 = arith.constant dense<0.000000e+00> : vector<16x128xf32>
    %10 = tpu.matmul %1, %9, %cst_9 {dimension_numbers = #tpu.dot_dimension_numbers<[1], [0], [0], [1], [0, 0, 1, 1], [], []>} : vector<16x128xf32>, vector<128x128xf32>, vector<16x128xf32> -> vector<16x128xf32>
    %c0_10 = arith.constant 0 : index
    %c0_11 = arith.constant 0 : index
    %11 = vector.load %arg6[%c0_10, %c0_11] : memref<1x128xf32, #tpu.memory_space<vmem>>, vector<1x128xf32>
    %12 = vector.broadcast %11 : vector<1x128xf32> to vector<16x128xf32>
    %13 = arith.addf %10, %12 : vector<16x128xf32>
    %c0_12 = arith.constant 0 : index
    %c0_13 = arith.constant 0 : index
    %14 = vector.load %arg4[%c0_12, %c0_13] : memref<128x128xf32, #tpu.memory_space<vmem>>, vector<128x128xf32>
    %cst_14 = arith.constant dense<0.000000e+00> : vector<16x128xf32>
    %15 = tpu.matmul %1, %14, %cst_14 {dimension_numbers = #tpu.dot_dimension_numbers<[1], [0], [0], [1], [0, 0, 1, 1], [], []>} : vector<16x128xf32>, vector<128x128xf32>, vector<16x128xf32> -> vector<16x128xf32>
    %c0_15 = arith.constant 0 : index
    %c0_16 = arith.constant 0 : index
    %16 = vector.load %arg7[%c0_15, %c0_16] : memref<1x128xf32, #tpu.memory_space<vmem>>, vector<1x128xf32>
    %17 = vector.broadcast %16 : vector<1x128xf32> to vector<16x128xf32>
    %18 = arith.addf %15, %17 : vector<16x128xf32>
    %cst_17 = arith.constant 0.000000e+00 : f32
    %19 = vector.broadcast %cst_17 : f32 to vector<2x8x8xf32>
    %cst_18 = arith.constant 0.000000e+00 : f32
    %20 = vector.broadcast %cst_18 : f32 to vector<16x128xf32>
    %21 = vector.extract_strided_slice %8 {offsets = [0, 0], sizes = [16, 32], strides = [1, 1]} : vector<16x128xf32> to vector<16x32xf32>
    %22 = vector.shape_cast %21 : vector<16x32xf32> to vector<2x8x32xf32>
    %23 = vector.extract_strided_slice %13 {offsets = [0, 0], sizes = [16, 32], strides = [1, 1]} : vector<16x128xf32> to vector<16x32xf32>
    %24 = vector.shape_cast %23 : vector<16x32xf32> to vector<2x8x32xf32>
    %25 = vector.extract_strided_slice %18 {offsets = [0, 0], sizes = [16, 32], strides = [1, 1]} : vector<16x128xf32> to vector<16x32xf32>
    %26 = vector.shape_cast %25 : vector<16x32xf32> to vector<2x8x32xf32>
    %cst_19 = arith.constant dense<0.000000e+00> : vector<2x8x8xf32>
    %27 = tpu.matmul %22, %24, %cst_19 {dimension_numbers = #tpu.dot_dimension_numbers<[2], [2], [1], [1], [0, 0, 0, 1, 1, 1], [0], [0]>} : vector<2x8x32xf32>, vector<2x8x32xf32>, vector<2x8x8xf32> -> vector<2x8x8xf32>
    %cst_20 = arith.constant dense<0xFF800000> : vector<2x8xf32>
    %28 = vector.multi_reduction <maximumf>, %27, %cst_20 [2] : vector<2x8x8xf32> to vector<2x8xf32>
    %29 = vector.shape_cast %28 : vector<2x8xf32> to vector<2x8x1xf32>
    %30 = vector.broadcast %29 : vector<2x8x1xf32> to vector<2x8x8xf32>
    %31 = arith.subf %27, %30 : vector<2x8x8xf32>
    %32 = math.exp %31 : vector<2x8x8xf32>
    %cst_21 = arith.constant dense<0.000000e+00> : vector<2x8xf32>
    %33 = vector.multi_reduction <add>, %32, %cst_21 [2] : vector<2x8x8xf32> to vector<2x8xf32>
    %34 = vector.shape_cast %33 : vector<2x8xf32> to vector<2x8x1xf32>
    %35 = vector.broadcast %34 : vector<2x8x1xf32> to vector<2x8x8xf32>
    %36 = arith.divf %32, %35 : vector<2x8x8xf32>
    %37 = arith.addf %19, %36 : vector<2x8x8xf32>
    %cst_22 = arith.constant dense<0.000000e+00> : vector<2x8x32xf32>
    %38 = tpu.matmul %36, %26, %cst_22 {dimension_numbers = #tpu.dot_dimension_numbers<[2], [1], [1], [2], [0, 0, 0, 1, 1, 2], [0], [0]>} : vector<2x8x8xf32>, vector<2x8x32xf32>, vector<2x8x32xf32> -> vector<2x8x32xf32>
    %39 = vector.shape_cast %38 : vector<2x8x32xf32> to vector<16x32xf32>
    %c0_23 = arith.constant 0 : index
    %c0_24 = arith.constant 0 : index
    %40 = vector.load %arg8[%c0_23, %c0_24] : memref<128x128xf32, #tpu.memory_space<vmem>>, vector<32x128xf32>
    %cst_25 = arith.constant dense<0.000000e+00> : vector<16x128xf32>
    %41 = tpu.matmul %39, %40, %cst_25 {dimension_numbers = #tpu.dot_dimension_numbers<[1], [0], [0], [1], [0, 0, 1, 1], [], []>} : vector<16x32xf32>, vector<32x128xf32>, vector<16x128xf32> -> vector<16x128xf32>
    %42 = arith.addf %20, %41 : vector<16x128xf32>
    %43 = vector.extract_strided_slice %8 {offsets = [0, 32], sizes = [16, 32], strides = [1, 1]} : vector<16x128xf32> to vector<16x32xf32>
    %44 = vector.shape_cast %43 : vector<16x32xf32> to vector<2x8x32xf32>
    %45 = vector.extract_strided_slice %13 {offsets = [0, 32], sizes = [16, 32], strides = [1, 1]} : vector<16x128xf32> to vector<16x32xf32>
    %46 = vector.shape_cast %45 : vector<16x32xf32> to vector<2x8x32xf32>
    %47 = vector.extract_strided_slice %18 {offsets = [0, 32], sizes = [16, 32], strides = [1, 1]} : vector<16x128xf32> to vector<16x32xf32>
    %48 = vector.shape_cast %47 : vector<16x32xf32> to vector<2x8x32xf32>
    %cst_26 = arith.constant dense<0.000000e+00> : vector<2x8x8xf32>
    %49 = tpu.matmul %44, %46, %cst_26 {dimension_numbers = #tpu.dot_dimension_numbers<[2], [2], [1], [1], [0, 0, 0, 1, 1, 1], [0], [0]>} : vector<2x8x32xf32>, vector<2x8x32xf32>, vector<2x8x8xf32> -> vector<2x8x8xf32>
    %cst_27 = arith.constant dense<0xFF800000> : vector<2x8xf32>
    %50 = vector.multi_reduction <maximumf>, %49, %cst_27 [2] : vector<2x8x8xf32> to vector<2x8xf32>
    %51 = vector.shape_cast %50 : vector<2x8xf32> to vector<2x8x1xf32>
    %52 = vector.broadcast %51 : vector<2x8x1xf32> to vector<2x8x8xf32>
    %53 = arith.subf %49, %52 : vector<2x8x8xf32>
    %54 = math.exp %53 : vector<2x8x8xf32>
    %cst_28 = arith.constant dense<0.000000e+00> : vector<2x8xf32>
    %55 = vector.multi_reduction <add>, %54, %cst_28 [2] : vector<2x8x8xf32> to vector<2x8xf32>
    %56 = vector.shape_cast %55 : vector<2x8xf32> to vector<2x8x1xf32>
    %57 = vector.broadcast %56 : vector<2x8x1xf32> to vector<2x8x8xf32>
    %58 = arith.divf %54, %57 : vector<2x8x8xf32>
    %59 = arith.addf %37, %58 : vector<2x8x8xf32>
    %cst_29 = arith.constant dense<0.000000e+00> : vector<2x8x32xf32>
    %60 = tpu.matmul %58, %48, %cst_29 {dimension_numbers = #tpu.dot_dimension_numbers<[2], [1], [1], [2], [0, 0, 0, 1, 1, 2], [0], [0]>} : vector<2x8x8xf32>, vector<2x8x32xf32>, vector<2x8x32xf32> -> vector<2x8x32xf32>
    %61 = vector.shape_cast %60 : vector<2x8x32xf32> to vector<16x32xf32>
    %c32 = arith.constant 32 : index
    %c0_30 = arith.constant 0 : index
    %62 = vector.load %arg8[%c32, %c0_30] : memref<128x128xf32, #tpu.memory_space<vmem>>, vector<32x128xf32>
    %cst_31 = arith.constant dense<0.000000e+00> : vector<16x128xf32>
    %63 = tpu.matmul %61, %62, %cst_31 {dimension_numbers = #tpu.dot_dimension_numbers<[1], [0], [0], [1], [0, 0, 1, 1], [], []>} : vector<16x32xf32>, vector<32x128xf32>, vector<16x128xf32> -> vector<16x128xf32>
    %64 = arith.addf %42, %63 : vector<16x128xf32>
    %65 = vector.extract_strided_slice %8 {offsets = [0, 64], sizes = [16, 32], strides = [1, 1]} : vector<16x128xf32> to vector<16x32xf32>
    %66 = vector.shape_cast %65 : vector<16x32xf32> to vector<2x8x32xf32>
    %67 = vector.extract_strided_slice %13 {offsets = [0, 64], sizes = [16, 32], strides = [1, 1]} : vector<16x128xf32> to vector<16x32xf32>
    %68 = vector.shape_cast %67 : vector<16x32xf32> to vector<2x8x32xf32>
    %69 = vector.extract_strided_slice %18 {offsets = [0, 64], sizes = [16, 32], strides = [1, 1]} : vector<16x128xf32> to vector<16x32xf32>
    %70 = vector.shape_cast %69 : vector<16x32xf32> to vector<2x8x32xf32>
    %cst_32 = arith.constant dense<0.000000e+00> : vector<2x8x8xf32>
    %71 = tpu.matmul %66, %68, %cst_32 {dimension_numbers = #tpu.dot_dimension_numbers<[2], [2], [1], [1], [0, 0, 0, 1, 1, 1], [0], [0]>} : vector<2x8x32xf32>, vector<2x8x32xf32>, vector<2x8x8xf32> -> vector<2x8x8xf32>
    %cst_33 = arith.constant dense<0xFF800000> : vector<2x8xf32>
    %72 = vector.multi_reduction <maximumf>, %71, %cst_33 [2] : vector<2x8x8xf32> to vector<2x8xf32>
    %73 = vector.shape_cast %72 : vector<2x8xf32> to vector<2x8x1xf32>
    %74 = vector.broadcast %73 : vector<2x8x1xf32> to vector<2x8x8xf32>
    %75 = arith.subf %71, %74 : vector<2x8x8xf32>
    %76 = math.exp %75 : vector<2x8x8xf32>
    %cst_34 = arith.constant dense<0.000000e+00> : vector<2x8xf32>
    %77 = vector.multi_reduction <add>, %76, %cst_34 [2] : vector<2x8x8xf32> to vector<2x8xf32>
    %78 = vector.shape_cast %77 : vector<2x8xf32> to vector<2x8x1xf32>
    %79 = vector.broadcast %78 : vector<2x8x1xf32> to vector<2x8x8xf32>
    %80 = arith.divf %76, %79 : vector<2x8x8xf32>
    %81 = arith.addf %59, %80 : vector<2x8x8xf32>
    %cst_35 = arith.constant dense<0.000000e+00> : vector<2x8x32xf32>
    %82 = tpu.matmul %80, %70, %cst_35 {dimension_numbers = #tpu.dot_dimension_numbers<[2], [1], [1], [2], [0, 0, 0, 1, 1, 2], [0], [0]>} : vector<2x8x8xf32>, vector<2x8x32xf32>, vector<2x8x32xf32> -> vector<2x8x32xf32>
    %83 = vector.shape_cast %82 : vector<2x8x32xf32> to vector<16x32xf32>
    %c64 = arith.constant 64 : index
    %c0_36 = arith.constant 0 : index
    %84 = vector.load %arg8[%c64, %c0_36] : memref<128x128xf32, #tpu.memory_space<vmem>>, vector<32x128xf32>
    %cst_37 = arith.constant dense<0.000000e+00> : vector<16x128xf32>
    %85 = tpu.matmul %83, %84, %cst_37 {dimension_numbers = #tpu.dot_dimension_numbers<[1], [0], [0], [1], [0, 0, 1, 1], [], []>} : vector<16x32xf32>, vector<32x128xf32>, vector<16x128xf32> -> vector<16x128xf32>
    %86 = arith.addf %64, %85 : vector<16x128xf32>
    %87 = vector.extract_strided_slice %8 {offsets = [0, 96], sizes = [16, 32], strides = [1, 1]} : vector<16x128xf32> to vector<16x32xf32>
    %88 = vector.shape_cast %87 : vector<16x32xf32> to vector<2x8x32xf32>
    %89 = vector.extract_strided_slice %13 {offsets = [0, 96], sizes = [16, 32], strides = [1, 1]} : vector<16x128xf32> to vector<16x32xf32>
    %90 = vector.shape_cast %89 : vector<16x32xf32> to vector<2x8x32xf32>
    %91 = vector.extract_strided_slice %18 {offsets = [0, 96], sizes = [16, 32], strides = [1, 1]} : vector<16x128xf32> to vector<16x32xf32>
    %92 = vector.shape_cast %91 : vector<16x32xf32> to vector<2x8x32xf32>
    %cst_38 = arith.constant dense<0.000000e+00> : vector<2x8x8xf32>
    %93 = tpu.matmul %88, %90, %cst_38 {dimension_numbers = #tpu.dot_dimension_numbers<[2], [2], [1], [1], [0, 0, 0, 1, 1, 1], [0], [0]>} : vector<2x8x32xf32>, vector<2x8x32xf32>, vector<2x8x8xf32> -> vector<2x8x8xf32>
    %cst_39 = arith.constant dense<0xFF800000> : vector<2x8xf32>
    %94 = vector.multi_reduction <maximumf>, %93, %cst_39 [2] : vector<2x8x8xf32> to vector<2x8xf32>
    %95 = vector.shape_cast %94 : vector<2x8xf32> to vector<2x8x1xf32>
    %96 = vector.broadcast %95 : vector<2x8x1xf32> to vector<2x8x8xf32>
    %97 = arith.subf %93, %96 : vector<2x8x8xf32>
    %98 = math.exp %97 : vector<2x8x8xf32>
    %cst_40 = arith.constant dense<0.000000e+00> : vector<2x8xf32>
    %99 = vector.multi_reduction <add>, %98, %cst_40 [2] : vector<2x8x8xf32> to vector<2x8xf32>
    %100 = vector.shape_cast %99 : vector<2x8xf32> to vector<2x8x1xf32>
    %101 = vector.broadcast %100 : vector<2x8x1xf32> to vector<2x8x8xf32>
    %102 = arith.divf %98, %101 : vector<2x8x8xf32>
    %103 = arith.addf %81, %102 : vector<2x8x8xf32>
    %cst_41 = arith.constant dense<0.000000e+00> : vector<2x8x32xf32>
    %104 = tpu.matmul %102, %92, %cst_41 {dimension_numbers = #tpu.dot_dimension_numbers<[2], [1], [1], [2], [0, 0, 0, 1, 1, 2], [0], [0]>} : vector<2x8x8xf32>, vector<2x8x32xf32>, vector<2x8x32xf32> -> vector<2x8x32xf32>
    %105 = vector.shape_cast %104 : vector<2x8x32xf32> to vector<16x32xf32>
    %c96 = arith.constant 96 : index
    %c0_42 = arith.constant 0 : index
    %106 = vector.load %arg8[%c96, %c0_42] : memref<128x128xf32, #tpu.memory_space<vmem>>, vector<32x128xf32>
    %cst_43 = arith.constant dense<0.000000e+00> : vector<16x128xf32>
    %107 = tpu.matmul %105, %106, %cst_43 {dimension_numbers = #tpu.dot_dimension_numbers<[1], [0], [0], [1], [0, 0, 1, 1], [], []>} : vector<16x32xf32>, vector<32x128xf32>, vector<16x128xf32> -> vector<16x128xf32>
    %108 = arith.addf %86, %107 : vector<16x128xf32>
    %c0_44 = arith.constant 0 : index
    %c0_45 = arith.constant 0 : index
    %109 = vector.load %arg9[%c0_44, %c0_45] : memref<1x128xf32, #tpu.memory_space<vmem>>, vector<1x128xf32>
    %110 = vector.broadcast %109 : vector<1x128xf32> to vector<16x128xf32>
    %111 = arith.addf %108, %110 : vector<16x128xf32>
    %c0_46 = arith.constant 0 : index
    %c0_47 = arith.constant 0 : index
    %112 = vector.load %arg10[%c0_46, %c0_47] : memref<1x128xf32, #tpu.memory_space<vmem>>, vector<1x128xf32>
    %113 = vector.broadcast %112 : vector<1x128xf32> to vector<16x128xf32>
    %114 = arith.mulf %111, %113 : vector<16x128xf32>
    %cst_48 = arith.constant dense<0.000000e+00> : vector<16xf32>
    %115 = vector.multi_reduction <add>, %114, %cst_48 [1] : vector<16x128xf32> to vector<16xf32>
    %116 = vector.shape_cast %115 : vector<16xf32> to vector<16x1xf32>
    %c0_49 = arith.constant 0 : index
    %c0_50 = arith.constant 0 : index
    %117 = vector.load %arg11[%c0_49, %c0_50] : memref<1x1xf32, #tpu.memory_space<vmem>>, vector<1x1xf32>
    %118 = vector.broadcast %117 : vector<1x1xf32> to vector<16x1xf32>
    %119 = arith.addf %116, %118 : vector<16x1xf32>
    %120 = arith.negf %119 : vector<16x1xf32>
    %121 = math.exp %120 : vector<16x1xf32>
    %cst_51 = arith.constant 1.000000e+00 : f32
    %122 = vector.broadcast %cst_51 : f32 to vector<16x1xf32>
    %123 = arith.addf %122, %121 : vector<16x1xf32>
    %124 = arith.divf %122, %123 : vector<16x1xf32>
    %125 = vector.shape_cast %124 : vector<16x1xf32> to vector<2x8xf32>
    %c0_52 = arith.constant 0 : index
    %c0_53 = arith.constant 0 : index
    %126 = vector.load %arg12[%c0_52, %c0_53] : memref<2x8xf32, #tpu.memory_space<vmem>>, vector<2x8xf32>
    tpu.vector_store %arg12[%c0_52, %c0_53], %125 {strides = array<i32>} : memref<2x8xf32, #tpu.memory_space<vmem>>, vector<2x8xf32>,
    %cst_54 = arith.constant 2.500000e-01 : f32
    %127 = vector.broadcast %cst_54 : f32 to vector<2x8x8xf32>
    %128 = arith.mulf %103, %127 : vector<2x8x8xf32>
    %129 = vector.shape_cast %128 : vector<2x8x8xf32> to vector<2x64xf32>
    %c0_55 = arith.constant 0 : index
    %c0_56 = arith.constant 0 : index
    %130 = vector.load %arg13[%c0_55, %c0_56] : memref<2x64xf32, #tpu.memory_space<vmem>>, vector<2x64xf32>
    tpu.vector_store %arg13[%c0_55, %c0_56], %129 {strides = array<i32>} : memref<2x64xf32, #tpu.memory_space<vmem>>, vector<2x64xf32>,
    return
  }
  func.func @transform_0(%arg0: i32) -> (i32, i32, i32) {
    %c0_i32 = arith.constant 0 : i32
    %c0_i32_0 = arith.constant 0 : i32
    %c0_i32_1 = arith.constant 0 : i32
    return %arg0, %c0_i32, %c0_i32_0 : i32, i32, i32
  }
  func.func @transform_1(%arg0: i32) -> (i32, i32) {
    %c0_i32 = arith.constant 0 : i32
    %c0_i32_0 = arith.constant 0 : i32
    %c0_i32_1 = arith.constant 0 : i32
    return %c0_i32, %c0_i32_0 : i32, i32
  }
  func.func @transform_2(%arg0: i32) -> (i32, i32) {
    %c0_i32 = arith.constant 0 : i32
    %c0_i32_0 = arith.constant 0 : i32
    %c0_i32_1 = arith.constant 0 : i32
    return %c0_i32, %c0_i32_0 : i32, i32
  }
  func.func @transform_3(%arg0: i32) -> (i32, i32) {
    %c0_i32 = arith.constant 0 : i32
    %c0_i32_0 = arith.constant 0 : i32
    %c0_i32_1 = arith.constant 0 : i32
    return %c0_i32, %c0_i32_0 : i32, i32
  }
  func.func @transform_4(%arg0: i32) -> (i32, i32) {
    %c0_i32 = arith.constant 0 : i32
    %c0_i32_0 = arith.constant 0 : i32
    %c0_i32_1 = arith.constant 0 : i32
    return %c0_i32, %c0_i32_0 : i32, i32
  }
  func.func @transform_5(%arg0: i32) -> (i32, i32) {
    %c0_i32 = arith.constant 0 : i32
    %c0_i32_0 = arith.constant 0 : i32
    %c0_i32_1 = arith.constant 0 : i32
    return %c0_i32, %c0_i32_0 : i32, i32
  }
  func.func @transform_6(%arg0: i32) -> (i32, i32) {
    %c0_i32 = arith.constant 0 : i32
    %c0_i32_0 = arith.constant 0 : i32
    %c0_i32_1 = arith.constant 0 : i32
    return %c0_i32, %c0_i32_0 : i32, i32
  }
  func.func @transform_7(%arg0: i32) -> (i32, i32) {
    %c0_i32 = arith.constant 0 : i32
    %c0_i32_0 = arith.constant 0 : i32
    %c0_i32_1 = arith.constant 0 : i32
    return %c0_i32, %c0_i32_0 : i32, i32
  }
  func.func @transform_8(%arg0: i32) -> (i32, i32) {
    %c0_i32 = arith.constant 0 : i32
    %c0_i32_0 = arith.constant 0 : i32
    %c0_i32_1 = arith.constant 0 : i32
    return %c0_i32, %c0_i32_0 : i32, i32
  }
  func.func @transform_9(%arg0: i32) -> (i32, i32) {
    %c0_i32 = arith.constant 0 : i32
    %c0_i32_0 = arith.constant 0 : i32
    %c0_i32_1 = arith.constant 0 : i32
    return %c0_i32, %c0_i32_0 : i32, i32
  }
  func.func @transform_10(%arg0: i32) -> (i32, i32) {
    %c0_i32 = arith.constant 0 : i32
    %c0_i32_0 = arith.constant 0 : i32
    %c0_i32_1 = arith.constant 0 : i32
    return %c0_i32, %c0_i32_0 : i32, i32
  }
  func.func @transform_11(%arg0: i32) -> (i32, i32) {
    %c0_i32 = arith.constant 0 : i32
    %c0_i32_0 = arith.constant 0 : i32
    return %arg0, %c0_i32 : i32, i32
  }
  func.func @transform_12(%arg0: i32) -> (i32, i32) {
    %c0_i32 = arith.constant 0 : i32
    %c0_i32_0 = arith.constant 0 : i32
    return %arg0, %c0_i32 : i32, i32
  }
}

</mosaic_0001>

<llo_original>
// kernel: tpu_custom_call.1
$region0: #{tpu_custom_call.1}
  #allocation0 [shape = 'u32[]', space=smem, size = 0x4, offset = 0x4, fixed_abs, tag = 'smem constant byte address 0x4 - core index']
  #allocation1 [shape = 'u32[144,128]{1,0:T(1,128)}', space=vmem, size = 0x12000, scoped, tag = 'internal scratch']
  #allocation2 [shape = 'f32[1,1]{1,0:T(1,128)S(1)}', space=vmem, size = 0x200, scoped, tag = 'scoped memory for tpu_custom_call.1']
  %s0 = inlined_call_operand.hbm [shape: f32[2,8,128], index: 0, kind: input, shape index: {}]
  %s1 = inlined_call_operand.hbm [shape: f32[128,128], index: 1, kind: input, shape index: {}]
  %s2 = inlined_call_operand.hbm [shape: f32[128,128], index: 2, kind: input, shape index: {}]
  %s3 = inlined_call_operand.hbm [shape: f32[128,128], index: 3, kind: input, shape index: {}]
  %s4 = inlined_call_operand.vmem [shape: f32[1,128], index: 4, kind: input, shape index: {}]
  %s5 = inlined_call_operand.vmem [shape: f32[1,128], index: 5, kind: input, shape index: {}]
  %s6 = inlined_call_operand.vmem [shape: f32[1,128], index: 6, kind: input, shape index: {}]
  %s7 = inlined_call_operand.hbm [shape: f32[128,128], index: 7, kind: input, shape index: {}]
  %s8 = inlined_call_operand.vmem [shape: f32[1,128], index: 8, kind: input, shape index: {}]
  %s9 = inlined_call_operand.vmem [shape: f32[1,128], index: 9, kind: input, shape index: {}]
  %s10 = inlined_call_operand.<no memory space> [shape: f32[1,1], index: 10, kind: input, shape index: {}]
  %s11 = inlined_call_operand.hbm [shape: f32[2,8], index: 11, kind: output, shape index: {0}]
  %s12 = inlined_call_operand.hbm [shape: f32[2,64], index: 12, kind: output, shape index: {1}]
  %13 = xla_tuple %s11, %s12
  %s14 = sld [smem:[#allocation0]]
  $region82: #{tpu_custom_call.1} parent=0
    _
  %s16 = ssub.s32 1, %s14
  %s17 = scalar_select 0, %s16, %s14
  %v18 = vstv %s10
  %19 = vst [vmem:[#allocation2] sm:$0x1] %v18
  $region1: #{tpu_custom_call.1} parent=0
    #allocation3 [shape = 'u8[8192]{0}', space=vmem, size = 0x2000, scoped, tag = 'input window, operand 0, single buffered']
    #allocation4 [shape = 's32[1]{0}', space=sflag, size = 0x4, scoped, tag = 'scoped memory for tpu_custom_call.1']
    #allocation5 [shape = 's32[1]{0}', space=sflag, size = 0x4, scoped, tag = 'scoped memory for tpu_custom_call.1']
    #allocation6 [shape = 'u8[65536]{0}', space=vmem, size = 0x10000, scoped, tag = 'input window, operand 1, single buffered']
    #allocation7 [shape = 's32[1]{0}', space=sflag, size = 0x4, scoped, tag = 'scoped memory for tpu_custom_call.1']
    #allocation8 [shape = 'u8[65536]{0}', space=vmem, size = 0x10000, scoped, tag = 'input window, operand 2, single buffered']
    #allocation9 [shape = 'u8[65536]{0}', space=vmem, size = 0x10000, scoped, tag = 'input window, operand 3, single buffered']
    #allocation10 [shape = 's32[1]{0}', space=sflag, size = 0x4, scoped, tag = 'scoped memory for tpu_custom_call.1']
    #allocation11 [shape = 'u8[65536]{0}', space=vmem, size = 0x10000, scoped, tag = 'input window, operand 7, single buffered']
    #allocation12 [shape = 'u8[1024]{0}', space=vmem, size = 0x400, scoped, tag = 'output window, operand 0, single buffered']
    #allocation13 [shape = 'u8[1024]{0}', space=vmem, size = 0x400, scoped, tag = 'output window, operand 1, single buffered']
    #allocation14 [shape = 's32[1]{0}', space=sflag, size = 0x4, scoped, tag = 'scoped memory for tpu_custom_call.1']
    %20 = vsyncpa [#allocation4], 0
    %21 = vsyncpa [#allocation7], 0
    %22 = vsyncpa [#allocation10], 0
    %23 = vsyncpa [#allocation5], 0
    %24 = vsyncpa [#allocation14], 0
    // Predicated region
    $region2: #{tpu_custom_call.1} parent=1 // pred_check
      _
    $region3: #{tpu_custom_call.1} parent=1 // pred_check_branch
      %26 = sbr.rel (0) target = $region5
    $region4: #{tpu_custom_call.1} parent=1 // pred_region
      %s28 = ssub.s32 256, 256
      %29 = vsyncadd [#allocation4], %s28
      %s30 = sshll.u32 [#allocation3], 4
      %s31 = int_to_ptr.vmem [resolvable:$true] %s30
      %36 = dma.hbm_to_vmem [thread:$0]  %s0, 256, %s31, [#allocation4], 128, 128, 8
    $region5: #{tpu_custom_call.1} parent=1 // pred_fallthru
      _
    // Predicated region
    $region6: #{tpu_custom_call.1} parent=1 // pred_check
      _
    $region7: #{tpu_custom_call.1} parent=1 // pred_check_branch
      %38 = sbr.rel (0) target = $region9
    $region8: #{tpu_custom_call.1} parent=1 // pred_region
      %s40 = ssub.s32 2048, 2048
      %41 = vsyncadd [#allocation7], %s40
      %s42 = sshll.u32 [#allocation6], 4
      %s43 = int_to_ptr.vmem [resolvable:$true] %s42
      %48 = dma.hbm_to_vmem [thread:$0]  %s1, 2048, %s43, [#allocation7], 128, 128, 8
    $region9: #{tpu_custom_call.1} parent=1 // pred_fallthru
      _
    // Predicated region
    $region10: #{tpu_custom_call.1} parent=1 // pred_check
      _
    $region11: #{tpu_custom_call.1} parent=1 // pred_check_branch
      %50 = sbr.rel (0) target = $region13
    $region12: #{tpu_custom_call.1} parent=1 // pred_region
      %s52 = ssub.s32 2048, 2048
      %53 = vsyncadd [#allocation7], %s52
      %s54 = sshll.u32 [#allocation8], 4
      %s55 = int_to_ptr.vmem [resolvable:$true] %s54
      %60 = dma.hbm_to_vmem [thread:$0]  %s2, 2048, %s55, [#allocation7], 128, 128, 8
    $region13: #{tpu_custom_call.1} parent=1 // pred_fallthru
      _
    // Predicated region
    $region14: #{tpu_custom_call.1} parent=1 // pred_check
      _
    $region15: #{tpu_custom_call.1} parent=1 // pred_check_branch
      %62 = sbr.rel (0) target = $region17
    $region16: #{tpu_custom_call.1} parent=1 // pred_region
      %s64 = ssub.s32 2048, 2048
      %65 = vsyncadd [#allocation10], %s64
      %s66 = sshll.u32 [#allocation9], 4
      %s67 = int_to_ptr.vmem [resolvable:$true] %s66
      %72 = dma.hbm_to_vmem [thread:$0]  %s3, 2048, %s67, [#allocation10], 128, 128, 8
    $region17: #{tpu_custom_call.1} parent=1 // pred_fallthru
      _
    // Predicated region
    $region18: #{tpu_custom_call.1} parent=1 // pred_check
      _
    $region19: #{tpu_custom_call.1} parent=1 // pred_check_branch
      %74 = sbr.rel (0) target = $region21
    $region20: #{tpu_custom_call.1} parent=1 // pred_region
      _
    $region21: #{tpu_custom_call.1} parent=1 // pred_fallthru
      _
    // Predicated region
    $region22: #{tpu_custom_call.1} parent=1 // pred_check
      _
    $region23: #{tpu_custom_call.1} parent=1 // pred_check_branch
      %76 = sbr.rel (0) target = $region25
    $region24: #{tpu_custom_call.1} parent=1 // pred_region
      _
    $region25: #{tpu_custom_call.1} parent=1 // pred_fallthru
      _
    // Predicated region
    $region26: #{tpu_custom_call.1} parent=1 // pred_check
      _
    $region27: #{tpu_custom_call.1} parent=1 // pred_check_branch
      %78 = sbr.rel (0) target = $region29
    $region28: #{tpu_custom_call.1} parent=1 // pred_region
      _
    $region29: #{tpu_custom_call.1} parent=1 // pred_fallthru
      _
    // Predicated region
    $region30: #{tpu_custom_call.1} parent=1 // pred_check
      _
    $region31: #{tpu_custom_call.1} parent=1 // pred_check_branch
      %80 = sbr.rel (0) target = $region33
    $region32: #{tpu_custom_call.1} parent=1 // pred_region
      %s82 = ssub.s32 2048, 2048
      %83 = vsyncadd [#allocation10], %s82
      %s84 = sshll.u32 [#allocation11], 4
      %s85 = int_to_ptr.vmem [resolvable:$true] %s84
      %90 = dma.hbm_to_vmem [thread:$0]  %s7, 2048, %s85, [#allocation10], 128, 128, 8
    $region33: #{tpu_custom_call.1} parent=1 // pred_fallthru
      _
    // Predicated region
    $region34: #{tpu_custom_call.1} parent=1 // pred_check
      _
    $region35: #{tpu_custom_call.1} parent=1 // pred_check_branch
      %92 = sbr.rel (0) target = $region37
    $region36: #{tpu_custom_call.1} parent=1 // pred_region
      _
    $region37: #{tpu_custom_call.1} parent=1 // pred_fallthru
      _
    // Predicated region
    $region38: #{tpu_custom_call.1} parent=1 // pred_check
      _
    $region39: #{tpu_custom_call.1} parent=1 // pred_check_branch
      %94 = sbr.rel (0) target = $region41
    $region40: #{tpu_custom_call.1} parent=1 // pred_region
      _
    $region41: #{tpu_custom_call.1} parent=1 // pred_fallthru
      _
    // Predicated region
    $region42: #{tpu_custom_call.1} parent=1 // pred_check
      _
    $region43: #{tpu_custom_call.1} parent=1 // pred_check_branch
      %96 = sbr.rel (0) target = $region45
    $region44: #{tpu_custom_call.1} parent=1 // pred_region
      _
    $region45: #{tpu_custom_call.1} parent=1 // pred_fallthru
      _
    // Predicated region
    $region46: #{tpu_custom_call.1} parent=1 // pred_check
      _
    $region47: #{tpu_custom_call.1} parent=1 // pred_check_branch
      %98 = sbr.rel (0) target = $region49
    $region48: #{tpu_custom_call.1} parent=1 // pred_region
      %99 = dma.done [#allocation4], 256
    $region49: #{tpu_custom_call.1} parent=1 // pred_fallthru
      _
    // Predicated region
    $region50: #{tpu_custom_call.1} parent=1 // pred_check
      _
    $region51: #{tpu_custom_call.1} parent=1 // pred_check_branch
      %101 = sbr.rel (0) target = $region53
    $region52: #{tpu_custom_call.1} parent=1 // pred_region
      %102 = dma.done [#allocation7], 2048
    $region53: #{tpu_custom_call.1} parent=1 // pred_fallthru
      _
    // Predicated region
    $region54: #{tpu_custom_call.1} parent=1 // pred_check
      _
    $region55: #{tpu_custom_call.1} parent=1 // pred_check_branch
      %104 = sbr.rel (0) target = $region57
    $region56: #{tpu_custom_call.1} parent=1 // pred_region
      %105 = dma.done [#allocation7], 2048
    $region57: #{tpu_custom_call.1} parent=1 // pred_fallthru
      _
    // Predicated region
    $region58: #{tpu_custom_call.1} parent=1 // pred_check
      _
    $region59: #{tpu_custom_call.1} parent=1 // pred_check_branch
      %107 = sbr.rel (0) target = $region61
    $region60: #{tpu_custom_call.1} parent=1 // pred_region
      %108 = dma.done [#allocation10], 2048
    $region61: #{tpu_custom_call.1} parent=1 // pred_fallthru
      _
    // Predicated region
    $region62: #{tpu_custom_call.1} parent=1 // pred_check
      _
    $region63: #{tpu_custom_call.1} parent=1 // pred_check_branch
      %110 = sbr.rel (0) target = $region65
    $region64: #{tpu_custom_call.1} parent=1 // pred_region
      %111 = dma.done [#allocation10], 2048
    $region65: #{tpu_custom_call.1} parent=1 // pred_fallthru
      _
    %v112 = vld [vmem:[#allocation3] sm:$0xff]
    %v113 = vld [vmem:[#allocation3 + $0x8] sm:$0xff]
    %v114 = vld [vmem:[#allocation6] sm:$0xff]
    %v115 = vld [vmem:[#allocation6 + $0x8] sm:$0xff]
    %v116 = vld [vmem:[#allocation6 + $0x10] sm:$0xff]
    %v117 = vld [vmem:[#allocation6 + $0x18] sm:$0xff]
    %v118 = vld [vmem:[#allocation6 + $0x20] sm:$0xff]
    %v119 = vld [vmem:[#allocation6 + $0x28] sm:$0xff]
    %v120 = vld [vmem:[#allocation6 + $0x30] sm:$0xff]
    %v121 = vld [vmem:[#allocation6 + $0x38] sm:$0xff]
    %v122 = vld [vmem:[#allocation6 + $0x40] sm:$0xff]
    %v123 = vld [vmem:[#allocation6 + $0x48] sm:$0xff]
    %v124 = vld [vmem:[#allocation6 + $0x50] sm:$0xff]
    %v125 = vld [vmem:[#allocation6 + $0x58] sm:$0xff]
    %v126 = vld [vmem:[#allocation6 + $0x60] sm:$0xff]
    %v127 = vld [vmem:[#allocation6 + $0x68] sm:$0xff]
    %v128 = vld [vmem:[#allocation6 + $0x70] sm:$0xff]
    %v129 = vld [vmem:[#allocation6 + $0x78] sm:$0xff]
    %v130 = vld [vmem:[%s4] sm:$0x1]
    %v132 = vlaneseq
    %v133 = vshrl.u32 %v132, 7
    %v134 = vsub.s32 0, %v133
    %v135 = vrot.slane %v130, %v134
    %137 = vmatprep.subr.mxu0 0.0
    %138 = vmatpush1.msra.mxu0 %v114
    %139 = vmatprep.subr.mxu0 0.0
    %140 = vmatpush1.msra.mxu0 %v115
    %141 = vmatprep.subr.mxu0 0.0
    %142 = vmatpush1.msra.mxu0 %v116
    %143 = vmatprep.subr.mxu0 0.0
    %144 = vmatpush1.msra.mxu0 %v117
    %145 = vmatprep.subr.mxu0 0.0
    %146 = vmatpush1.msra.mxu0 %v118
    %147 = vmatprep.subr.mxu0 0.0
    %148 = vmatpush1.msra.mxu0 %v119
    %149 = vmatprep.subr.mxu0 0.0
    %150 = vmatpush1.msra.mxu0 %v120
    %151 = vmatprep.subr.mxu0 0.0
    %152 = vmatpush1.msra.mxu0 %v121
    %153 = vmatprep.subr.mxu0 0.0
    %154 = vmatpush1.msra.mxu0 %v122
    %155 = vmatprep.subr.mxu0 0.0
    %156 = vmatpush1.msra.mxu0 %v123
    %157 = vmatprep.subr.mxu0 0.0
    %158 = vmatpush1.msra.mxu0 %v124
    %159 = vmatprep.subr.mxu0 0.0
    %160 = vmatpush1.msra.mxu0 %v125
    %161 = vmatprep.subr.mxu0 0.0
    %162 = vmatpush1.msra.mxu0 %v126
    %163 = vmatprep.subr.mxu0 0.0
    %164 = vmatpush1.msra.mxu0 %v127
    %165 = vmatprep.subr.mxu0 0.0
    %166 = vmatpush1.msra.mxu0 %v128
    %167 = vmatprep.subr.mxu0 0.0
    %168 = vmatpush1.msra.mxu0 %v129
    %169 = vmatprep.subr.mxu0 0.0
    %170 = vmatpush1.msra.mxu0 0.0
    %171 = vmatprep.subr.mxu0 0.0
    %172 = vmatpush1.msra.mxu0 0.0
    %173 = vmatprep.subr.mxu0 0.0
    %174 = vmatpush1.msra.mxu0 0.0
    %175 = vmatprep.subr.mxu0 0.0
    %176 = vmatpush1.msra.mxu0 0.0
    %177 = vmatprep.subr.mxu0 0.0
    %178 = vmatpush1.msra.mxu0 0.0
    %179 = vmatprep.subr.mxu0 0.0
    %180 = vmatpush1.msra.mxu0 0.0
    %181 = vmatprep.subr.mxu0 0.0
    %182 = vmatpush1.msra.mxu0 0.0
    %183 = vmatprep.subr.mxu0 0.0
    %184 = vmatpush1.msra.mxu0 0.0
    %185 = vmatprep.subr.mxu0 0.0
    %186 = vmatpush1.msra.mxu0 0.0
    %187 = vmatprep.subr.mxu0 0.0
    %188 = vmatpush1.msra.mxu0 0.0
    %189 = vmatprep.subr.mxu0 0.0
    %190 = vmatpush1.msra.mxu0 0.0
    %191 = vmatprep.subr.mxu0 0.0
    %192 = vmatpush1.msra.mxu0 0.0
    %193 = vmatprep.subr.mxu0 0.0
    %194 = vmatpush1.msra.mxu0 0.0
    %195 = vmatprep.subr.mxu0 0.0
    %196 = vmatpush1.msra.mxu0 0.0
    %197 = vmatprep.subr.mxu0 0.0
    %198 = vmatpush1.msra.mxu0 0.0
    %199 = vmatprep.subr.mxu0 0.0
    %200 = vmatpush1.msra.mxu0 0.0
    %201 = vmatprep.mubr.f32.mxu0 0.0
    %202 = vmatmul.mubr.f32.gmra.mrb[0].mxu0 %v112
    %v203 = vpop.f32.mrb[0].mxu0
    %v204 = vadd.f32 %v135, %v203
    %v205 = vpop.f32.mrb[0].mxu0
    %206 = vmatprep.mubr.f32.mxu0 0.0
    %207 = vmatmul.mubr.f32.gmra.mrb[0].mxu0 %v113
    %v208 = vpop.f32.mrb[0].mxu0
    %v209 = vadd.f32 %v135, %v208
    %v210 = vpop.f32.mrb[0].mxu0
    %211 = vdwg.mxu0
    %v212 = vmul.f32 %v204, 0.17677669
    %v213 = vmul.f32 %v209, 0.17677669
    %v214 = vld [vmem:[#allocation8] sm:$0xff]
    %v215 = vld [vmem:[#allocation8 + $0x8] sm:$0xff]
    %v216 = vld [vmem:[#allocation8 + $0x10] sm:$0xff]
    %v217 = vld [vmem:[#allocation8 + $0x18] sm:$0xff]
    %v218 = vld [vmem:[#allocation8 + $0x20] sm:$0xff]
    %v219 = vld [vmem:[#allocation8 + $0x28] sm:$0xff]
    %v220 = vld [vmem:[#allocation8 + $0x30] sm:$0xff]
    %v221 = vld [vmem:[#allocation8 + $0x38] sm:$0xff]
    %v222 = vld [vmem:[#allocation8 + $0x40] sm:$0xff]
    %v223 = vld [vmem:[#allocation8 + $0x48] sm:$0xff]
    %v224 = vld [vmem:[#allocation8 + $0x50] sm:$0xff]
    %v225 = vld [vmem:[#allocation8 + $0x58] sm:$0xff]
    %v226 = vld [vmem:[#allocation8 + $0x60] sm:$0xff]
    %v227 = vld [vmem:[#allocation8 + $0x68] sm:$0xff]
    %v228 = vld [vmem:[#allocation8 + $0x70] sm:$0xff]
    %v229 = vld [vmem:[#allocation8 + $0x78] sm:$0xff]
    %v230 = vld [vmem:[%s5] sm:$0x1]
    %v232 = vlaneseq
    %v233 = vshrl.u32 %v232, 7
    %v234 = vsub.s32 0, %v233
    %v235 = vrot.slane %v230, %v234
    %237 = vmatprep.subr.mxu0 0.0
    %238 = vmatpush1.msra.mxu0 %v214
    %239 = vmatprep.subr.mxu0 0.0
    %240 = vmatpush1.msra.mxu0 %v215
    %241 = vmatprep.subr.mxu0 0.0
    %242 = vmatpush1.msra.mxu0 %v216
    %243 = vmatprep.subr.mxu0 0.0
    %244 = vmatpush1.msra.mxu0 %v217
    %245 = vmatprep.subr.mxu0 0.0
    %246 = vmatpush1.msra.mxu0 %v218
    %247 = vmatprep.subr.mxu0 0.0
    %248 = vmatpush1.msra.mxu0 %v219
    %249 = vmatprep.subr.mxu0 0.0
    %250 = vmatpush1.msra.mxu0 %v220
    %251 = vmatprep.subr.mxu0 0.0
    %252 = vmatpush1.msra.mxu0 %v221
    %253 = vmatprep.subr.mxu0 0.0
    %254 = vmatpush1.msra.mxu0 %v222
    %255 = vmatprep.subr.mxu0 0.0
    %256 = vmatpush1.msra.mxu0 %v223
    %257 = vmatprep.subr.mxu0 0.0
    %258 = vmatpush1.msra.mxu0 %v224
    %259 = vmatprep.subr.mxu0 0.0
    %260 = vmatpush1.msra.mxu0 %v225
    %261 = vmatprep.subr.mxu0 0.0
    %262 = vmatpush1.msra.mxu0 %v226
    %263 = vmatprep.subr.mxu0 0.0
    %264 = vmatpush1.msra.mxu0 %v227
    %265 = vmatprep.subr.mxu0 0.0
    %266 = vmatpush1.msra.mxu0 %v228
    %267 = vmatprep.subr.mxu0 0.0
    %268 = vmatpush1.msra.mxu0 %v229
    %269 = vmatprep.subr.mxu0 0.0
    %270 = vmatpush1.msra.mxu0 0.0
    %271 = vmatprep.subr.mxu0 0.0
    %272 = vmatpush1.msra.mxu0 0.0
    %273 = vmatprep.subr.mxu0 0.0
    %274 = vmatpush1.msra.mxu0 0.0
    %275 = vmatprep.subr.mxu0 0.0
    %276 = vmatpush1.msra.mxu0 0.0
    %277 = vmatprep.subr.mxu0 0.0
    %278 = vmatpush1.msra.mxu0 0.0
    %279 = vmatprep.subr.mxu0 0.0
    %280 = vmatpush1.msra.mxu0 0.0
    %281 = vmatprep.subr.mxu0 0.0
    %282 = vmatpush1.msra.mxu0 0.0
    %283 = vmatprep.subr.mxu0 0.0
    %284 = vmatpush1.msra.mxu0 0.0
    %285 = vmatprep.subr.mxu0 0.0
    %286 = vmatpush1.msra.mxu0 0.0
    %287 = vmatprep.subr.mxu0 0.0
    %288 = vmatpush1.msra.mxu0 0.0
    %289 = vmatprep.subr.mxu0 0.0
    %290 = vmatpush1.msra.mxu0 0.0
    %291 = vmatprep.subr.mxu0 0.0
    %292 = vmatpush1.msra.mxu0 0.0
    %293 = vmatprep.subr.mxu0 0.0
    %294 = vmatpush1.msra.mxu0 0.0
    %295 = vmatprep.subr.mxu0 0.0
    %296 = vmatpush1.msra.mxu0 0.0
    %297 = vmatprep.subr.mxu0 0.0
    %298 = vmatpush1.msra.mxu0 0.0
    %299 = vmatprep.subr.mxu0 0.0
    %300 = vmatpush1.msra.mxu0 0.0
    %301 = vmatprep.mubr.f32.mxu0 0.0
    %302 = vmatmul.mubr.f32.gmra.mrb[0].mxu0 %v112
    %v303 = vpop.f32.mrb[0].mxu0
    %v304 = vadd.f32 %v235, %v303
    %v305 = vpop.f32.mrb[0].mxu0
    %306 = vmatprep.mubr.f32.mxu0 0.0
    %307 = vmatmul.mubr.f32.gmra.mrb[0].mxu0 %v113
    %v308 = vpop.f32.mrb[0].mxu0
    %v309 = vadd.f32 %v235, %v308
    %v310 = vpop.f32.mrb[0].mxu0
    %311 = vdwg.mxu0
    %v312 = vld [vmem:[#allocation9] sm:$0xff]
    %v313 = vld [vmem:[#allocation9 + $0x8] sm:$0xff]
    %v314 = vld [vmem:[#allocation9 + $0x10] sm:$0xff]
    %v315 = vld [vmem:[#allocation9 + $0x18] sm:$0xff]
    %v316 = vld [vmem:[#allocation9 + $0x20] sm:$0xff]
    %v317 = vld [vmem:[#allocation9 + $0x28] sm:$0xff]
    %v318 = vld [vmem:[#allocation9 + $0x30] sm:$0xff]
    %v319 = vld [vmem:[#allocation9 + $0x38] sm:$0xff]
    %v320 = vld [vmem:[#allocation9 + $0x40] sm:$0xff]
    %v321 = vld [vmem:[#allocation9 + $0x48] sm:$0xff]
    %v322 = vld [vmem:[#allocation9 + $0x50] sm:$0xff]
    %v323 = vld [vmem:[#allocation9 + $0x58] sm:$0xff]
    %v324 = vld [vmem:[#allocation9 + $0x60] sm:$0xff]
    %v325 = vld [vmem:[#allocation9 + $0x68] sm:$0xff]
    %v326 = vld [vmem:[#allocation9 + $0x70] sm:$0xff]
    %v327 = vld [vmem:[#allocation9 + $0x78] sm:$0xff]
    %v328 = vld [vmem:[%s6] sm:$0x1]
    %v330 = vlaneseq
    %v331 = vshrl.u32 %v330, 7
    %v332 = vsub.s32 0, %v331
    %v333 = vrot.slane %v328, %v332
    %335 = vmatprep.subr.mxu0 0.0
    %336 = vmatpush1.msra.mxu0 %v312
    %337 = vmatprep.subr.mxu0 0.0
    %338 = vmatpush1.msra.mxu0 %v313
    %339 = vmatprep.subr.mxu0 0.0
    %340 = vmatpush1.msra.mxu0 %v314
    %341 = vmatprep.subr.mxu0 0.0
    %342 = vmatpush1.msra.mxu0 %v315
    %343 = vmatprep.subr.mxu0 0.0
    %344 = vmatpush1.msra.mxu0 %v316
    %345 = vmatprep.subr.mxu0 0.0
    %346 = vmatpush1.msra.mxu0 %v317
    %347 = vmatprep.subr.mxu0 0.0
    %348 = vmatpush1.msra.mxu0 %v318
    %349 = vmatprep.subr.mxu0 0.0
    %350 = vmatpush1.msra.mxu0 %v319
    %351 = vmatprep.subr.mxu0 0.0
    %352 = vmatpush1.msra.mxu0 %v320
    %353 = vmatprep.subr.mxu0 0.0
    %354 = vmatpush1.msra.mxu0 %v321
    %355 = vmatprep.subr.mxu0 0.0
    %356 = vmatpush1.msra.mxu0 %v322
    %357 = vmatprep.subr.mxu0 0.0
    %358 = vmatpush1.msra.mxu0 %v323
    %359 = vmatprep.subr.mxu0 0.0
    %360 = vmatpush1.msra.mxu0 %v324
    %361 = vmatprep.subr.mxu0 0.0
    %362 = vmatpush1.msra.mxu0 %v325
    %363 = vmatprep.subr.mxu0 0.0
    %364 = vmatpush1.msra.mxu0 %v326
    %365 = vmatprep.subr.mxu0 0.0
    %366 = vmatpush1.msra.mxu0 %v327
    %367 = vmatprep.subr.mxu0 0.0
    %368 = vmatpush1.msra.mxu0 0.0
    %369 = vmatprep.subr.mxu0 0.0
    %370 = vmatpush1.msra.mxu0 0.0
    %371 = vmatprep.subr.mxu0 0.0
    %372 = vmatpush1.msra.mxu0 0.0
    %373 = vmatprep.subr.mxu0 0.0
    %374 = vmatpush1.msra.mxu0 0.0
    %375 = vmatprep.subr.mxu0 0.0
    %376 = vmatpush1.msra.mxu0 0.0
    %377 = vmatprep.subr.mxu0 0.0
    %378 = vmatpush1.msra.mxu0 0.0
    %379 = vmatprep.subr.mxu0 0.0
    %380 = vmatpush1.msra.mxu0 0.0
    %381 = vmatprep.subr.mxu0 0.0
    %382 = vmatpush1.msra.mxu0 0.0
    %383 = vmatprep.subr.mxu0 0.0
    %384 = vmatpush1.msra.mxu0 0.0
    %385 = vmatprep.subr.mxu0 0.0
    %386 = vmatpush1.msra.mxu0 0.0
    %387 = vmatprep.subr.mxu0 0.0
    %388 = vmatpush1.msra.mxu0 0.0
    %389 = vmatprep.subr.mxu0 0.0
    %390 = vmatpush1.msra.mxu0 0.0
    %391 = vmatprep.subr.mxu0 0.0
    %392 = vmatpush1.msra.mxu0 0.0
    %393 = vmatprep.subr.mxu0 0.0
    %394 = vmatpush1.msra.mxu0 0.0
    %395 = vmatprep.subr.mxu0 0.0
    %396 = vmatpush1.msra.mxu0 0.0
    %397 = vmatprep.subr.mxu0 0.0
    %398 = vmatpush1.msra.mxu0 0.0
    %399 = vmatprep.mubr.f32.mxu0 0.0
    %400 = vmatmul.mubr.f32.gmra.mrb[0].mxu0 %v112
    %v401 = vpop.f32.mrb[0].mxu0
    %v402 = vadd.f32 %v333, %v401
    %v403 = vpop.f32.mrb[0].mxu0
    %404 = vmatprep.mubr.f32.mxu0 0.0
    %405 = vmatmul.mubr.f32.gmra.mrb[0].mxu0 %v113
    %v406 = vpop.f32.mrb[0].mxu0
    %v407 = vadd.f32 %v333, %v406
    %v408 = vpop.f32.mrb[0].mxu0
    %409 = vdwg.mxu0
    %vm410 = vcmask 261120
    %v412 = vsel %vm410, %v212, 0
    %v415 = vsel %vm410, %v304, 0
    %417 = vmatprep.subr.mxu0 0.0
    %418 = vmatpush1.xpose.msra.mxu0 %v415
    %419 = vmatprep.subr.mxu0 0.0
    %420 = vmatpush1.xpose.msra.mxu0 0.0
    %421 = vmatprep.subr.mxu0 0.0
    %422 = vmatpush1.xpose.msra.mxu0 0.0
    %423 = vmatprep.subr.mxu0 0.0
    %424 = vmatpush1.xpose.msra.mxu0 0.0
    %425 = vmatprep.subr.mxu0 0.0
    %426 = vmatpush1.xpose.msra.mxu0 0.0
    %427 = vmatprep.subr.mxu0 0.0
    %428 = vmatpush1.xpose.msra.mxu0 0.0
    %429 = vmatprep.subr.mxu0 0.0
    %430 = vmatpush1.xpose.msra.mxu0 0.0
    %431 = vmatprep.subr.mxu0 0.0
    %432 = vmatpush1.xpose.msra.mxu0 0.0
    %433 = vmatprep.subr.mxu0 0.0
    %434 = vmatpush1.xpose.msra.mxu0 0.0
    %435 = vmatprep.subr.mxu0 0.0
    %436 = vmatpush1.xpose.msra.mxu0 0.0
    %437 = vmatprep.subr.mxu0 0.0
    %438 = vmatpush1.xpose.msra.mxu0 0.0
    %439 = vmatprep.subr.mxu0 0.0
    %440 = vmatpush1.xpose.msra.mxu0 0.0
    %441 = vmatprep.subr.mxu0 0.0
    %442 = vmatpush1.xpose.msra.mxu0 0.0
    %443 = vmatprep.subr.mxu0 0.0
    %444 = vmatpush1.xpose.msra.mxu0 0.0
    %445 = vmatprep.subr.mxu0 0.0
    %446 = vmatpush1.xpose.msra.mxu0 0.0
    %447 = vmatprep.subr.mxu0 0.0
    %448 = vmatpush1.xpose.msra.mxu0 0.0
    %449 = vmatprep.subr.mxu0 0.0
    %450 = vmatpush1.xpose.msra.mxu0 0.0
    %451 = vmatprep.subr.mxu0 0.0
    %452 = vmatpush1.xpose.msra.mxu0 0.0
    %453 = vmatprep.subr.mxu0 0.0
    %454 = vmatpush1.xpose.msra.mxu0 0.0
    %455 = vmatprep.subr.mxu0 0.0
    %456 = vmatpush1.xpose.msra.mxu0 0.0
    %457 = vmatprep.subr.mxu0 0.0
    %458 = vmatpush1.xpose.msra.mxu0 0.0
    %459 = vmatprep.subr.mxu0 0.0
    %460 = vmatpush1.xpose.msra.mxu0 0.0
    %461 = vmatprep.subr.mxu0 0.0
    %462 = vmatpush1.xpose.msra.mxu0 0.0
    %463 = vmatprep.subr.mxu0 0.0
    %464 = vmatpush1.xpose.msra.mxu0 0.0
    %465 = vmatprep.subr.mxu0 0.0
    %466 = vmatpush1.xpose.msra.mxu0 0.0
    %467 = vmatprep.subr.mxu0 0.0
    %468 = vmatpush1.xpose.msra.mxu0 0.0
    %469 = vmatprep.subr.mxu0 0.0
    %470 = vmatpush1.xpose.msra.mxu0 0.0
    %471 = vmatprep.subr.mxu0 0.0
    %472 = vmatpush1.xpose.msra.mxu0 0.0
    %473 = vmatprep.subr.mxu0 0.0
    %474 = vmatpush1.xpose.msra.mxu0 0.0
    %475 = vmatprep.subr.mxu0 0.0
    %476 = vmatpush1.xpose.msra.mxu0 0.0
    %477 = vmatprep.subr.mxu0 0.0
    %478 = vmatpush1.xpose.msra.mxu0 0.0
    %479 = vmatprep.subr.mxu0 0.0
    %480 = vmatpush1.xpose.msra.mxu0 0.0
    %481 = vmatprep.mubr.f32.mxu0 0.0
    %482 = vmatmul.mubr.f32.gmra.mrb[0].mxu0 %v412
    %v483 = vpop.f32.mrb[0].mxu0
    %v484 = vadd.f32 0.0, %v483
    %v485 = vpop.f32.mrb[0].mxu0
    %486 = vdwg.mxu0
    %v488 = vsel %vm410, %v213, 0
    %v491 = vsel %vm410, %v309, 0
    %493 = vmatprep.subr.mxu0 0.0
    %494 = vmatpush1.xpose.msra.mxu0 %v491
    %495 = vmatprep.subr.mxu0 0.0
    %496 = vmatpush1.xpose.msra.mxu0 0.0
    %497 = vmatprep.subr.mxu0 0.0
    %498 = vmatpush1.xpose.msra.mxu0 0.0
    %499 = vmatprep.subr.mxu0 0.0
    %500 = vmatpush1.xpose.msra.mxu0 0.0
    %501 = vmatprep.subr.mxu0 0.0
    %502 = vmatpush1.xpose.msra.mxu0 0.0
    %503 = vmatprep.subr.mxu0 0.0
    %504 = vmatpush1.xpose.msra.mxu0 0.0
    %505 = vmatprep.subr.mxu0 0.0
    %506 = vmatpush1.xpose.msra.mxu0 0.0
    %507 = vmatprep.subr.mxu0 0.0
    %508 = vmatpush1.xpose.msra.mxu0 0.0
    %509 = vmatprep.subr.mxu0 0.0
    %510 = vmatpush1.xpose.msra.mxu0 0.0
    %511 = vmatprep.subr.mxu0 0.0
    %512 = vmatpush1.xpose.msra.mxu0 0.0
    %513 = vmatprep.subr.mxu0 0.0
    %514 = vmatpush1.xpose.msra.mxu0 0.0
    %515 = vmatprep.subr.mxu0 0.0
    %516 = vmatpush1.xpose.msra.mxu0 0.0
    %517 = vmatprep.subr.mxu0 0.0
    %518 = vmatpush1.xpose.msra.mxu0 0.0
    %519 = vmatprep.subr.mxu0 0.0
    %520 = vmatpush1.xpose.msra.mxu0 0.0
    %521 = vmatprep.subr.mxu0 0.0
    %522 = vmatpush1.xpose.msra.mxu0 0.0
    %523 = vmatprep.subr.mxu0 0.0
    %524 = vmatpush1.xpose.msra.mxu0 0.0
    %525 = vmatprep.subr.mxu0 0.0
    %526 = vmatpush1.xpose.msra.mxu0 0.0
    %527 = vmatprep.subr.mxu0 0.0
    %528 = vmatpush1.xpose.msra.mxu0 0.0
    %529 = vmatprep.subr.mxu0 0.0
    %530 = vmatpush1.xpose.msra.mxu0 0.0
    %531 = vmatprep.subr.mxu0 0.0
    %532 = vmatpush1.xpose.msra.mxu0 0.0
    %533 = vmatprep.subr.mxu0 0.0
    %534 = vmatpush1.xpose.msra.mxu0 0.0
    %535 = vmatprep.subr.mxu0 0.0
    %536 = vmatpush1.xpose.msra.mxu0 0.0
    %537 = vmatprep.subr.mxu0 0.0
    %538 = vmatpush1.xpose.msra.mxu0 0.0
    %539 = vmatprep.subr.mxu0 0.0
    %540 = vmatpush1.xpose.msra.mxu0 0.0
    %541 = vmatprep.subr.mxu0 0.0
    %542 = vmatpush1.xpose.msra.mxu0 0.0
    %543 = vmatprep.subr.mxu0 0.0
    %544 = vmatpush1.xpose.msra.mxu0 0.0
    %545 = vmatprep.subr.mxu0 0.0
    %546 = vmatpush1.xpose.msra.mxu0 0.0
    %547 = vmatprep.subr.mxu0 0.0
    %548 = vmatpush1.xpose.msra.mxu0 0.0
    %549 = vmatprep.subr.mxu0 0.0
    %550 = vmatpush1.xpose.msra.mxu0 0.0
    %551 = vmatprep.subr.mxu0 0.0
    %552 = vmatpush1.xpose.msra.mxu0 0.0
    %553 = vmatprep.subr.mxu0 0.0
    %554 = vmatpush1.xpose.msra.mxu0 0.0
    %555 = vmatprep.subr.mxu0 0.0
    %556 = vmatpush1.xpose.msra.mxu0 0.0
    %557 = vmatprep.mubr.f32.mxu0 0.0
    %558 = vmatmul.mubr.f32.gmra.mrb[0].mxu0 %v488
    %v559 = vpop.f32.mrb[0].mxu0
    %v560 = vadd.f32 0.0, %v559
    %v561 = vpop.f32.mrb[0].mxu0
    %562 = vdwg.mxu0
    %vm563 = vcmask 64512
    %v564 = vsel %vm563, %v484, -inf
    %565 = vmax.xlane.f32.xlu0 %v564
    %v566 = vpop.xlane.xlu0 %565
    %v567 = vsel %vm563, %v560, -inf
    %568 = vmax.xlane.f32.xlu0 %v567
    %v569 = vpop.xlane.xlu0 %568
    %v570 = vsub.f32 %v484, %v566
    %v571 = vsub.f32 %v560, %v569
    %v572 = vmul.f32 %v570, 1.442695
    %v573 = vpow.pop %v572
    %v574 = vmul.f32 %v571, 1.442695
    %v575 = vpow.pop %v574
    %v576 = vsel %vm563, %v573, 0.0
    %577 = vadd.xlane.f32.xlu0 %v576
    %v578 = vpop.xlane.xlu0 %577
    %v579 = vsel %vm563, %v575, 0.0
    %580 = vadd.xlane.f32.xlu0 %v579
    %v581 = vpop.xlane.xlu0 %580
    %v582 = vrcp.pop %v578
    %v583 = vmul.f32 %v573, %v582
    %v584 = vrcp.pop %v581
    %v585 = vmul.f32 %v575, %v584
    %v586 = vadd.f32 %v583, 0.0
    %v587 = vadd.f32 %v585, 0.0
    %v589 = vsel %vm563, %v583, 0
    %591 = vmatprep.subr.mxu0 0.0
    %592 = vmatpush1.msra.mxu0 %v402
    %593 = vmatprep.subr.mxu0 0.0
    %594 = vmatpush1.msra.mxu0 0.0
    %595 = vmatprep.subr.mxu0 0.0
    %596 = vmatpush1.msra.mxu0 0.0
    %597 = vmatprep.subr.mxu0 0.0
    %598 = vmatpush1.msra.mxu0 0.0
    %599 = vmatprep.subr.mxu0 0.0
    %600 = vmatpush1.msra.mxu0 0.0
    %601 = vmatprep.subr.mxu0 0.0
    %602 = vmatpush1.msra.mxu0 0.0
    %603 = vmatprep.subr.mxu0 0.0
    %604 = vmatpush1.msra.mxu0 0.0
    %605 = vmatprep.subr.mxu0 0.0
    %606 = vmatpush1.msra.mxu0 0.0
    %607 = vmatprep.subr.mxu0 0.0
    %608 = vmatpush1.msra.mxu0 0.0
    %609 = vmatprep.subr.mxu0 0.0
    %610 = vmatpush1.msra.mxu0 0.0
    %611 = vmatprep.subr.mxu0 0.0
    %612 = vmatpush1.msra.mxu0 0.0
    %613 = vmatprep.subr.mxu0 0.0
    %614 = vmatpush1.msra.mxu0 0.0
    %615 = vmatprep.subr.mxu0 0.0
    %616 = vmatpush1.msra.mxu0 0.0
    %617 = vmatprep.subr.mxu0 0.0
    %618 = vmatpush1.msra.mxu0 0.0
    %619 = vmatprep.subr.mxu0 0.0
    %620 = vmatpush1.msra.mxu0 0.0
    %621 = vmatprep.subr.mxu0 0.0
    %622 = vmatpush1.msra.mxu0 0.0
    %623 = vmatprep.subr.mxu0 0.0
    %624 = vmatpush1.msra.mxu0 0.0
    %625 = vmatprep.subr.mxu0 0.0
    %626 = vmatpush1.msra.mxu0 0.0
    %627 = vmatprep.subr.mxu0 0.0
    %628 = vmatpush1.msra.mxu0 0.0
    %629 = vmatprep.subr.mxu0 0.0
    %630 = vmatpush1.msra.mxu0 0.0
    %631 = vmatprep.subr.mxu0 0.0
    %632 = vmatpush1.msra.mxu0 0.0
    %633 = vmatprep.subr.mxu0 0.0
    %634 = vmatpush1.msra.mxu0 0.0
    %635 = vmatprep.subr.mxu0 0.0
    %636 = vmatpush1.msra.mxu0 0.0
    %637 = vmatprep.subr.mxu0 0.0
    %638 = vmatpush1.msra.mxu0 0.0
    %639 = vmatprep.subr.mxu0 0.0
    %640 = vmatpush1.msra.mxu0 0.0
    %641 = vmatprep.subr.mxu0 0.0
    %642 = vmatpush1.msra.mxu0 0.0
    %643 = vmatprep.subr.mxu0 0.0
    %644 = vmatpush1.msra.mxu0 0.0
    %645 = vmatprep.subr.mxu0 0.0
    %646 = vmatpush1.msra.mxu0 0.0
    %647 = vmatprep.subr.mxu0 0.0
    %648 = vmatpush1.msra.mxu0 0.0
    %649 = vmatprep.subr.mxu0 0.0
    %650 = vmatpush1.msra.mxu0 0.0
    %651 = vmatprep.subr.mxu0 0.0
    %652 = vmatpush1.msra.mxu0 0.0
    %653 = vmatprep.subr.mxu0 0.0
    %654 = vmatpush1.msra.mxu0 0.0
    %655 = vmatprep.mubr.f32.mxu0 0.0
    %656 = vmatmul.mubr.f32.gmra.mrb[0].mxu0 %v589
    %v657 = vpop.f32.mrb[0].mxu0
    %v658 = vadd.f32 0.0, %v657
    %v659 = vpop.f32.mrb[0].mxu0
    %660 = vdwg.mxu0
    %v662 = vsel %vm563, %v585, 0
    %664 = vmatprep.subr.mxu0 0.0
    %665 = vmatpush1.msra.mxu0 %v407
    %666 = vmatprep.subr.mxu0 0.0
    %667 = vmatpush1.msra.mxu0 0.0
    %668 = vmatprep.subr.mxu0 0.0
    %669 = vmatpush1.msra.mxu0 0.0
    %670 = vmatprep.subr.mxu0 0.0
    %671 = vmatpush1.msra.mxu0 0.0
    %672 = vmatprep.subr.mxu0 0.0
    %673 = vmatpush1.msra.mxu0 0.0
    %674 = vmatprep.subr.mxu0 0.0
    %675 = vmatpush1.msra.mxu0 0.0
    %676 = vmatprep.subr.mxu0 0.0
    %677 = vmatpush1.msra.mxu0 0.0
    %678 = vmatprep.subr.mxu0 0.0
    %679 = vmatpush1.msra.mxu0 0.0
    %680 = vmatprep.subr.mxu0 0.0
    %681 = vmatpush1.msra.mxu0 0.0
    %682 = vmatprep.subr.mxu0 0.0
    %683 = vmatpush1.msra.mxu0 0.0
    %684 = vmatprep.subr.mxu0 0.0
    %685 = vmatpush1.msra.mxu0 0.0
    %686 = vmatprep.subr.mxu0 0.0
    %687 = vmatpush1.msra.mxu0 0.0
    %688 = vmatprep.subr.mxu0 0.0
    %689 = vmatpush1.msra.mxu0 0.0
    %690 = vmatprep.subr.mxu0 0.0
    %691 = vmatpush1.msra.mxu0 0.0
    %692 = vmatprep.subr.mxu0 0.0
    %693 = vmatpush1.msra.mxu0 0.0
    %694 = vmatprep.subr.mxu0 0.0
    %695 = vmatpush1.msra.mxu0 0.0
    %696 = vmatprep.subr.mxu0 0.0
    %697 = vmatpush1.msra.mxu0 0.0
    %698 = vmatprep.subr.mxu0 0.0
    %699 = vmatpush1.msra.mxu0 0.0
    %700 = vmatprep.subr.mxu0 0.0
    %701 = vmatpush1.msra.mxu0 0.0
    %702 = vmatprep.subr.mxu0 0.0
    %703 = vmatpush1.msra.mxu0 0.0
    %704 = vmatprep.subr.mxu0 0.0
    %705 = vmatpush1.msra.mxu0 0.0
    %706 = vmatprep.subr.mxu0 0.0
    %707 = vmatpush1.msra.mxu0 0.0
    %708 = vmatprep.subr.mxu0 0.0
    %709 = vmatpush1.msra.mxu0 0.0
    %710 = vmatprep.subr.mxu0 0.0
    %711 = vmatpush1.msra.mxu0 0.0
    %712 = vmatprep.subr.mxu0 0.0
    %713 = vmatpush1.msra.mxu0 0.0
    %714 = vmatprep.subr.mxu0 0.0
    %715 = vmatpush1.msra.mxu0 0.0
    %716 = vmatprep.subr.mxu0 0.0
    %717 = vmatpush1.msra.mxu0 0.0
    %718 = vmatprep.subr.mxu0 0.0
    %719 = vmatpush1.msra.mxu0 0.0
    %720 = vmatprep.subr.mxu0 0.0
    %721 = vmatpush1.msra.mxu0 0.0
    %722 = vmatprep.subr.mxu0 0.0
    %723 = vmatpush1.msra.mxu0 0.0
    %724 = vmatprep.subr.mxu0 0.0
    %725 = vmatpush1.msra.mxu0 0.0
    %726 = vmatprep.subr.mxu0 0.0
    %727 = vmatpush1.msra.mxu0 0.0
    %728 = vmatprep.mubr.f32.mxu0 0.0
    %729 = vmatmul.mubr.f32.gmra.mrb[0].mxu0 %v662
    %v730 = vpop.f32.mrb[0].mxu0
    %v731 = vadd.f32 0.0, %v730
    %v732 = vpop.f32.mrb[0].mxu0
    %733 = vdwg.mxu0
    %v734 = vld [vmem:[#allocation11] sm:$0xff]
    %v735 = vld [vmem:[#allocation11 + $0x8] sm:$0xff]
    %v736 = vld [vmem:[#allocation11 + $0x10] sm:$0xff]
    %v737 = vld [vmem:[#allocation11 + $0x18] sm:$0xff]
    %738 = vrot.lane.b32.xlu0 %v212, 96
    %v739 = vpop.permute.xlu0 %738
    %740 = vrot.lane.b32.xlu0 %v304, 96
    %v741 = vpop.permute.xlu0 %740
    %v742 = vsel %vm410, %v739, 0
    %v744 = vsel %vm410, %v741, 0
    %746 = vmatprep.subr.mxu0 0.0
    %747 = vmatpush1.xpose.msra.mxu0 %v744
    %748 = vmatprep.subr.mxu0 0.0
    %749 = vmatpush1.xpose.msra.mxu0 0.0
    %750 = vmatprep.subr.mxu0 0.0
    %751 = vmatpush1.xpose.msra.mxu0 0.0
    %752 = vmatprep.subr.mxu0 0.0
    %753 = vmatpush1.xpose.msra.mxu0 0.0
    %754 = vmatprep.subr.mxu0 0.0
    %755 = vmatpush1.xpose.msra.mxu0 0.0
    %756 = vmatprep.subr.mxu0 0.0
    %757 = vmatpush1.xpose.msra.mxu0 0.0
    %758 = vmatprep.subr.mxu0 0.0
    %759 = vmatpush1.xpose.msra.mxu0 0.0
    %760 = vmatprep.subr.mxu0 0.0
    %761 = vmatpush1.xpose.msra.mxu0 0.0
    %762 = vmatprep.subr.mxu0 0.0
    %763 = vmatpush1.xpose.msra.mxu0 0.0
    %764 = vmatprep.subr.mxu0 0.0
    %765 = vmatpush1.xpose.msra.mxu0 0.0
    %766 = vmatprep.subr.mxu0 0.0
    %767 = vmatpush1.xpose.msra.mxu0 0.0
    %768 = vmatprep.subr.mxu0 0.0
    %769 = vmatpush1.xpose.msra.mxu0 0.0
    %770 = vmatprep.subr.mxu0 0.0
    %771 = vmatpush1.xpose.msra.mxu0 0.0
    %772 = vmatprep.subr.mxu0 0.0
    %773 = vmatpush1.xpose.msra.mxu0 0.0
    %774 = vmatprep.subr.mxu0 0.0
    %775 = vmatpush1.xpose.msra.mxu0 0.0
    %776 = vmatprep.subr.mxu0 0.0
    %777 = vmatpush1.xpose.msra.mxu0 0.0
    %778 = vmatprep.subr.mxu0 0.0
    %779 = vmatpush1.xpose.msra.mxu0 0.0
    %780 = vmatprep.subr.mxu0 0.0
    %781 = vmatpush1.xpose.msra.mxu0 0.0
    %782 = vmatprep.subr.mxu0 0.0
    %783 = vmatpush1.xpose.msra.mxu0 0.0
    %784 = vmatprep.subr.mxu0 0.0
    %785 = vmatpush1.xpose.msra.mxu0 0.0
    %786 = vmatprep.subr.mxu0 0.0
    %787 = vmatpush1.xpose.msra.mxu0 0.0
    %788 = vmatprep.subr.mxu0 0.0
    %789 = vmatpush1.xpose.msra.mxu0 0.0
    %790 = vmatprep.subr.mxu0 0.0
    %791 = vmatpush1.xpose.msra.mxu0 0.0
    %792 = vmatprep.subr.mxu0 0.0
    %793 = vmatpush1.xpose.msra.mxu0 0.0
    %794 = vmatprep.subr.mxu0 0.0
    %795 = vmatpush1.xpose.msra.mxu0 0.0
    %796 = vmatprep.subr.mxu0 0.0
    %797 = vmatpush1.xpose.msra.mxu0 0.0
    %798 = vmatprep.subr.mxu0 0.0
    %799 = vmatpush1.xpose.msra.mxu0 0.0
    %800 = vmatprep.subr.mxu0 0.0
    %801 = vmatpush1.xpose.msra.mxu0 0.0
    %802 = vmatprep.subr.mxu0 0.0
    %803 = vmatpush1.xpose.msra.mxu0 0.0
    %804 = vmatprep.subr.mxu0 0.0
    %805 = vmatpush1.xpose.msra.mxu0 0.0
    %806 = vmatprep.subr.mxu0 0.0
    %807 = vmatpush1.xpose.msra.mxu0 0.0
    %808 = vmatprep.subr.mxu0 0.0
    %809 = vmatpush1.xpose.msra.mxu0 0.0
    %810 = vmatprep.mubr.f32.mxu0 0.0
    %811 = vmatmul.mubr.f32.gmra.mrb[0].mxu0 %v742
    %v812 = vpop.f32.mrb[0].mxu0
    %v813 = vadd.f32 0.0, %v812
    %v814 = vpop.f32.mrb[0].mxu0
    %815 = vdwg.mxu0
    %816 = vrot.lane.b32.xlu0 %v213, 96
    %v817 = vpop.permute.xlu0 %816
    %818 = vrot.lane.b32.xlu0 %v309, 96
    %v819 = vpop.permute.xlu0 %818
    %v820 = vsel %vm410, %v817, 0
    %v822 = vsel %vm410, %v819, 0
    %824 = vmatprep.subr.mxu0 0.0
    %825 = vmatpush1.xpose.msra.mxu0 %v822
    %826 = vmatprep.subr.mxu0 0.0
    %827 = vmatpush1.xpose.msra.mxu0 0.0
    %828 = vmatprep.subr.mxu0 0.0
    %829 = vmatpush1.xpose.msra.mxu0 0.0
    %830 = vmatprep.subr.mxu0 0.0
    %831 = vmatpush1.xpose.msra.mxu0 0.0
    %832 = vmatprep.subr.mxu0 0.0
    %833 = vmatpush1.xpose.msra.mxu0 0.0
    %834 = vmatprep.subr.mxu0 0.0
    %835 = vmatpush1.xpose.msra.mxu0 0.0
    %836 = vmatprep.subr.mxu0 0.0
    %837 = vmatpush1.xpose.msra.mxu0 0.0
    %838 = vmatprep.subr.mxu0 0.0
    %839 = vmatpush1.xpose.msra.mxu0 0.0
    %840 = vmatprep.subr.mxu0 0.0
    %841 = vmatpush1.xpose.msra.mxu0 0.0
    %842 = vmatprep.subr.mxu0 0.0
    %843 = vmatpush1.xpose.msra.mxu0 0.0
    %844 = vmatprep.subr.mxu0 0.0
    %845 = vmatpush1.xpose.msra.mxu0 0.0
    %846 = vmatprep.subr.mxu0 0.0
    %847 = vmatpush1.xpose.msra.mxu0 0.0
    %848 = vmatprep.subr.mxu0 0.0
    %849 = vmatpush1.xpose.msra.mxu0 0.0
    %850 = vmatprep.subr.mxu0 0.0
    %851 = vmatpush1.xpose.msra.mxu0 0.0
    %852 = vmatprep.subr.mxu0 0.0
    %853 = vmatpush1.xpose.msra.mxu0 0.0
    %854 = vmatprep.subr.mxu0 0.0
    %855 = vmatpush1.xpose.msra.mxu0 0.0
    %856 = vmatprep.subr.mxu0 0.0
    %857 = vmatpush1.xpose.msra.mxu0 0.0
    %858 = vmatprep.subr.mxu0 0.0
    %859 = vmatpush1.xpose.msra.mxu0 0.0
    %860 = vmatprep.subr.mxu0 0.0
    %861 = vmatpush1.xpose.msra.mxu0 0.0
    %862 = vmatprep.subr.mxu0 0.0
    %863 = vmatpush1.xpose.msra.mxu0 0.0
    %864 = vmatprep.subr.mxu0 0.0
    %865 = vmatpush1.xpose.msra.mxu0 0.0
    %866 = vmatprep.subr.mxu0 0.0
    %867 = vmatpush1.xpose.msra.mxu0 0.0
    %868 = vmatprep.subr.mxu0 0.0
    %869 = vmatpush1.xpose.msra.mxu0 0.0
    %870 = vmatprep.subr.mxu0 0.0
    %871 = vmatpush1.xpose.msra.mxu0 0.0
    %872 = vmatprep.subr.mxu0 0.0
    %873 = vmatpush1.xpose.msra.mxu0 0.0
    %874 = vmatprep.subr.mxu0 0.0
    %875 = vmatpush1.xpose.msra.mxu0 0.0
    %876 = vmatprep.subr.mxu0 0.0
    %877 = vmatpush1.xpose.msra.mxu0 0.0
    %878 = vmatprep.subr.mxu0 0.0
    %879 = vmatpush1.xpose.msra.mxu0 0.0
    %880 = vmatprep.subr.mxu0 0.0
    %881 = vmatpush1.xpose.msra.mxu0 0.0
    %882 = vmatprep.subr.mxu0 0.0
    %883 = vmatpush1.xpose.msra.mxu0 0.0
    %884 = vmatprep.subr.mxu0 0.0
    %885 = vmatpush1.xpose.msra.mxu0 0.0
    %886 = vmatprep.subr.mxu0 0.0
    %887 = vmatpush1.xpose.msra.mxu0 0.0
    %888 = vmatprep.mubr.f32.mxu0 0.0
    %889 = vmatmul.mubr.f32.gmra.mrb[0].mxu0 %v820
    %v890 = vpop.f32.mrb[0].mxu0
    %v891 = vadd.f32 0.0, %v890
    %v892 = vpop.f32.mrb[0].mxu0
    %893 = vdwg.mxu0
    %v894 = vsel %vm563, %v813, -inf
    %895 = vmax.xlane.f32.xlu0 %v894
    %v896 = vpop.xlane.xlu0 %895
    %v897 = vsel %vm563, %v891, -inf
    %898 = vmax.xlane.f32.xlu0 %v897
    %v899 = vpop.xlane.xlu0 %898
    %v900 = vsub.f32 %v813, %v896
    %v901 = vsub.f32 %v891, %v899
    %v902 = vmul.f32 %v900, 1.442695
    %v903 = vpow.pop %v902
    %v904 = vmul.f32 %v901, 1.442695
    %v905 = vpow.pop %v904
    %v906 = vsel %vm563, %v903, 0.0
    %907 = vadd.xlane.f32.xlu0 %v906
    %v908 = vpop.xlane.xlu0 %907
    %v909 = vsel %vm563, %v905, 0.0
    %910 = vadd.xlane.f32.xlu0 %v909
    %v911 = vpop.xlane.xlu0 %910
    %v912 = vrcp.pop %v908
    %v913 = vmul.f32 %v903, %v912
    %v914 = vrcp.pop %v911
    %v915 = vmul.f32 %v905, %v914
    %v916 = vadd.f32 %v586, %v913
    %v917 = vadd.f32 %v587, %v915
    %919 = vrot.lane.b32.xlu0 %v402, 96
    %v920 = vpop.permute.xlu0 %919
    %v923 = vsel %vm563, %v913, 0
    %925 = vmatprep.subr.mxu0 0.0
    %926 = vmatpush1.msra.mxu0 %v920
    %927 = vmatprep.subr.mxu0 0.0
    %928 = vmatpush1.msra.mxu0 0.0
    %929 = vmatprep.subr.mxu0 0.0
    %930 = vmatpush1.msra.mxu0 0.0
    %931 = vmatprep.subr.mxu0 0.0
    %932 = vmatpush1.msra.mxu0 0.0
    %933 = vmatprep.subr.mxu0 0.0
    %934 = vmatpush1.msra.mxu0 0.0
    %935 = vmatprep.subr.mxu0 0.0
    %936 = vmatpush1.msra.mxu0 0.0
    %937 = vmatprep.subr.mxu0 0.0
    %938 = vmatpush1.msra.mxu0 0.0
    %939 = vmatprep.subr.mxu0 0.0
    %940 = vmatpush1.msra.mxu0 0.0
    %941 = vmatprep.subr.mxu0 0.0
    %942 = vmatpush1.msra.mxu0 0.0
    %943 = vmatprep.subr.mxu0 0.0
    %944 = vmatpush1.msra.mxu0 0.0
    %945 = vmatprep.subr.mxu0 0.0
    %946 = vmatpush1.msra.mxu0 0.0
    %947 = vmatprep.subr.mxu0 0.0
    %948 = vmatpush1.msra.mxu0 0.0
    %949 = vmatprep.subr.mxu0 0.0
    %950 = vmatpush1.msra.mxu0 0.0
    %951 = vmatprep.subr.mxu0 0.0
    %952 = vmatpush1.msra.mxu0 0.0
    %953 = vmatprep.subr.mxu0 0.0
    %954 = vmatpush1.msra.mxu0 0.0
    %955 = vmatprep.subr.mxu0 0.0
    %956 = vmatpush1.msra.mxu0 0.0
    %957 = vmatprep.subr.mxu0 0.0
    %958 = vmatpush1.msra.mxu0 0.0
    %959 = vmatprep.subr.mxu0 0.0
    %960 = vmatpush1.msra.mxu0 0.0
    %961 = vmatprep.subr.mxu0 0.0
    %962 = vmatpush1.msra.mxu0 0.0
    %963 = vmatprep.subr.mxu0 0.0
    %964 = vmatpush1.msra.mxu0 0.0
    %965 = vmatprep.subr.mxu0 0.0
    %966 = vmatpush1.msra.mxu0 0.0
    %967 = vmatprep.subr.mxu0 0.0
    %968 = vmatpush1.msra.mxu0 0.0
    %969 = vmatprep.subr.mxu0 0.0
    %970 = vmatpush1.msra.mxu0 0.0
    %971 = vmatprep.subr.mxu0 0.0
    %972 = vmatpush1.msra.mxu0 0.0
    %973 = vmatprep.subr.mxu0 0.0
    %974 = vmatpush1.msra.mxu0 0.0
    %975 = vmatprep.subr.mxu0 0.0
    %976 = vmatpush1.msra.mxu0 0.0
    %977 = vmatprep.subr.mxu0 0.0
    %978 = vmatpush1.msra.mxu0 0.0
    %979 = vmatprep.subr.mxu0 0.0
    %980 = vmatpush1.msra.mxu0 0.0
    %981 = vmatprep.subr.mxu0 0.0
    %982 = vmatpush1.msra.mxu0 0.0
    %983 = vmatprep.subr.mxu0 0.0
    %984 = vmatpush1.msra.mxu0 0.0
    %985 = vmatprep.subr.mxu0 0.0
    %986 = vmatpush1.msra.mxu0 0.0
    %987 = vmatprep.subr.mxu0 0.0
    %988 = vmatpush1.msra.mxu0 0.0
    %989 = vmatprep.mubr.f32.mxu0 0.0
    %990 = vmatmul.mubr.f32.gmra.mrb[0].mxu0 %v923
    %v991 = vpop.f32.mrb[0].mxu0
    %v992 = vadd.f32 0.0, %v991
    %v993 = vpop.f32.mrb[0].mxu0
    %994 = vdwg.mxu0
    %996 = vrot.lane.b32.xlu0 %v407, 96
    %v997 = vpop.permute.xlu0 %996
    %v1000 = vsel %vm563, %v915, 0
    %1002 = vmatprep.subr.mxu0 0.0
    %1003 = vmatpush1.msra.mxu0 %v997
    %1004 = vmatprep.subr.mxu0 0.0
    %1005 = vmatpush1.msra.mxu0 0.0
    %1006 = vmatprep.subr.mxu0 0.0
    %1007 = vmatpush1.msra.mxu0 0.0
    %1008 = vmatprep.subr.mxu0 0.0
    %1009 = vmatpush1.msra.mxu0 0.0
    %1010 = vmatprep.subr.mxu0 0.0
    %1011 = vmatpush1.msra.mxu0 0.0
    %1012 = vmatprep.subr.mxu0 0.0
    %1013 = vmatpush1.msra.mxu0 0.0
    %1014 = vmatprep.subr.mxu0 0.0
    %1015 = vmatpush1.msra.mxu0 0.0
    %1016 = vmatprep.subr.mxu0 0.0
    %1017 = vmatpush1.msra.mxu0 0.0
    %1018 = vmatprep.subr.mxu0 0.0
    %1019 = vmatpush1.msra.mxu0 0.0
    %1020 = vmatprep.subr.mxu0 0.0
    %1021 = vmatpush1.msra.mxu0 0.0
    %1022 = vmatprep.subr.mxu0 0.0
    %1023 = vmatpush1.msra.mxu0 0.0
    %1024 = vmatprep.subr.mxu0 0.0
    %1025 = vmatpush1.msra.mxu0 0.0
    %1026 = vmatprep.subr.mxu0 0.0
    %1027 = vmatpush1.msra.mxu0 0.0
    %1028 = vmatprep.subr.mxu0 0.0
    %1029 = vmatpush1.msra.mxu0 0.0
    %1030 = vmatprep.subr.mxu0 0.0
    %1031 = vmatpush1.msra.mxu0 0.0
    %1032 = vmatprep.subr.mxu0 0.0
    %1033 = vmatpush1.msra.mxu0 0.0
    %1034 = vmatprep.subr.mxu0 0.0
    %1035 = vmatpush1.msra.mxu0 0.0
    %1036 = vmatprep.subr.mxu0 0.0
    %1037 = vmatpush1.msra.mxu0 0.0
    %1038 = vmatprep.subr.mxu0 0.0
    %1039 = vmatpush1.msra.mxu0 0.0
    %1040 = vmatprep.subr.mxu0 0.0
    %1041 = vmatpush1.msra.mxu0 0.0
    %1042 = vmatprep.subr.mxu0 0.0
    %1043 = vmatpush1.msra.mxu0 0.0
    %1044 = vmatprep.subr.mxu0 0.0
    %1045 = vmatpush1.msra.mxu0 0.0
    %1046 = vmatprep.subr.mxu0 0.0
    %1047 = vmatpush1.msra.mxu0 0.0
    %1048 = vmatprep.subr.mxu0 0.0
    %1049 = vmatpush1.msra.mxu0 0.0
    %1050 = vmatprep.subr.mxu0 0.0
    %1051 = vmatpush1.msra.mxu0 0.0
    %1052 = vmatprep.subr.mxu0 0.0
    %1053 = vmatpush1.msra.mxu0 0.0
    %1054 = vmatprep.subr.mxu0 0.0
    %1055 = vmatpush1.msra.mxu0 0.0
    %1056 = vmatprep.subr.mxu0 0.0
    %1057 = vmatpush1.msra.mxu0 0.0
    %1058 = vmatprep.subr.mxu0 0.0
    %1059 = vmatpush1.msra.mxu0 0.0
    %1060 = vmatprep.subr.mxu0 0.0
    %1061 = vmatpush1.msra.mxu0 0.0
    %1062 = vmatprep.subr.mxu0 0.0
    %1063 = vmatpush1.msra.mxu0 0.0
    %1064 = vmatprep.subr.mxu0 0.0
    %1065 = vmatpush1.msra.mxu0 0.0
    %1066 = vmatprep.mubr.f32.mxu0 0.0
    %1067 = vmatmul.mubr.f32.gmra.mrb[0].mxu0 %v1000
    %v1068 = vpop.f32.mrb[0].mxu0
    %v1069 = vadd.f32 0.0, %v1068
    %v1070 = vpop.f32.mrb[0].mxu0
    %1071 = vdwg.mxu0
    %v1072 = vld [vmem:[#allocation11 + $0x20] sm:$0xff]
    %v1073 = vld [vmem:[#allocation11 + $0x28] sm:$0xff]
    %v1074 = vld [vmem:[#allocation11 + $0x30] sm:$0xff]
    %v1075 = vld [vmem:[#allocation11 + $0x38] sm:$0xff]
    %v1077 = vsel %vm410, %v992, 0
    %v1080 = vsel %vm410, %v1069, 0
    %1082 = vmatprep.subr.mxu0 0.0
    %1083 = vmatpush1.msra.mxu0 %v1072
    %1084 = vmatprep.subr.mxu0 0.0
    %1085 = vmatpush1.msra.mxu0 %v1073
    %1086 = vmatprep.subr.mxu0 0.0
    %1087 = vmatpush1.msra.mxu0 %v1074
    %1088 = vmatprep.subr.mxu0 0.0
    %1089 = vmatpush1.msra.mxu0 %v1075
    %1090 = vmatprep.subr.mxu0 0.0
    %1091 = vmatpush1.msra.mxu0 0.0
    %1092 = vmatprep.subr.mxu0 0.0
    %1093 = vmatpush1.msra.mxu0 0.0
    %1094 = vmatprep.subr.mxu0 0.0
    %1095 = vmatpush1.msra.mxu0 0.0
    %1096 = vmatprep.subr.mxu0 0.0
    %1097 = vmatpush1.msra.mxu0 0.0
    %1098 = vmatprep.subr.mxu0 0.0
    %1099 = vmatpush1.msra.mxu0 0.0
    %1100 = vmatprep.subr.mxu0 0.0
    %1101 = vmatpush1.msra.mxu0 0.0
    %1102 = vmatprep.subr.mxu0 0.0
    %1103 = vmatpush1.msra.mxu0 0.0
    %1104 = vmatprep.subr.mxu0 0.0
    %1105 = vmatpush1.msra.mxu0 0.0
    %1106 = vmatprep.subr.mxu0 0.0
    %1107 = vmatpush1.msra.mxu0 0.0
    %1108 = vmatprep.subr.mxu0 0.0
    %1109 = vmatpush1.msra.mxu0 0.0
    %1110 = vmatprep.subr.mxu0 0.0
    %1111 = vmatpush1.msra.mxu0 0.0
    %1112 = vmatprep.subr.mxu0 0.0
    %1113 = vmatpush1.msra.mxu0 0.0
    %1114 = vmatprep.subr.mxu0 0.0
    %1115 = vmatpush1.msra.mxu0 0.0
    %1116 = vmatprep.subr.mxu0 0.0
    %1117 = vmatpush1.msra.mxu0 0.0
    %1118 = vmatprep.subr.mxu0 0.0
    %1119 = vmatpush1.msra.mxu0 0.0
    %1120 = vmatprep.subr.mxu0 0.0
    %1121 = vmatpush1.msra.mxu0 0.0
    %1122 = vmatprep.subr.mxu0 0.0
    %1123 = vmatpush1.msra.mxu0 0.0
    %1124 = vmatprep.subr.mxu0 0.0
    %1125 = vmatpush1.msra.mxu0 0.0
    %1126 = vmatprep.subr.mxu0 0.0
    %1127 = vmatpush1.msra.mxu0 0.0
    %1128 = vmatprep.subr.mxu0 0.0
    %1129 = vmatpush1.msra.mxu0 0.0
    %1130 = vmatprep.subr.mxu0 0.0
    %1131 = vmatpush1.msra.mxu0 0.0
    %1132 = vmatprep.subr.mxu0 0.0
    %1133 = vmatpush1.msra.mxu0 0.0
    %1134 = vmatprep.subr.mxu0 0.0
    %1135 = vmatpush1.msra.mxu0 0.0
    %1136 = vmatprep.subr.mxu0 0.0
    %1137 = vmatpush1.msra.mxu0 0.0
    %1138 = vmatprep.subr.mxu0 0.0
    %1139 = vmatpush1.msra.mxu0 0.0
    %1140 = vmatprep.subr.mxu0 0.0
    %1141 = vmatpush1.msra.mxu0 0.0
    %1142 = vmatprep.subr.mxu0 0.0
    %1143 = vmatpush1.msra.mxu0 0.0
    %1144 = vmatprep.subr.mxu0 0.0
    %1145 = vmatpush1.msra.mxu0 0.0
    %1146 = vmatprep.mubr.f32.mxu0 0.0
    %1147 = vmatmul.mubr.f32.gmra.mrb[0].mxu0 %v1077
    %v1148 = vpop.f32.mrb[0].mxu0
    %v1149 = vadd.f32 0.0, %v1148
    %v1150 = vpop.f32.mrb[0].mxu0
    %1151 = vmatprep.mubr.f32.mxu0 0.0
    %1152 = vmatmul.mubr.f32.gmra.mrb[0].mxu0 %v1080
    %v1153 = vpop.f32.mrb[0].mxu0
    %v1154 = vadd.f32 0.0, %v1153
    %v1155 = vpop.f32.mrb[0].mxu0
    %1156 = vdwg.mxu0
    %v1158 = vsel %vm410, %v658, 0
    %v1161 = vsel %vm410, %v731, 0
    %1163 = vmatprep.subr.mxu0 0.0
    %1164 = vmatpush1.msra.mxu0 %v734
    %1165 = vmatprep.subr.mxu0 0.0
    %1166 = vmatpush1.msra.mxu0 %v735
    %1167 = vmatprep.subr.mxu0 0.0
    %1168 = vmatpush1.msra.mxu0 %v736
    %1169 = vmatprep.subr.mxu0 0.0
    %1170 = vmatpush1.msra.mxu0 %v737
    %1171 = vmatprep.subr.mxu0 0.0
    %1172 = vmatpush1.msra.mxu0 0.0
    %1173 = vmatprep.subr.mxu0 0.0
    %1174 = vmatpush1.msra.mxu0 0.0
    %1175 = vmatprep.subr.mxu0 0.0
    %1176 = vmatpush1.msra.mxu0 0.0
    %1177 = vmatprep.subr.mxu0 0.0
    %1178 = vmatpush1.msra.mxu0 0.0
    %1179 = vmatprep.subr.mxu0 0.0
    %1180 = vmatpush1.msra.mxu0 0.0
    %1181 = vmatprep.subr.mxu0 0.0
    %1182 = vmatpush1.msra.mxu0 0.0
    %1183 = vmatprep.subr.mxu0 0.0
    %1184 = vmatpush1.msra.mxu0 0.0
    %1185 = vmatprep.subr.mxu0 0.0
    %1186 = vmatpush1.msra.mxu0 0.0
    %1187 = vmatprep.subr.mxu0 0.0
    %1188 = vmatpush1.msra.mxu0 0.0
    %1189 = vmatprep.subr.mxu0 0.0
    %1190 = vmatpush1.msra.mxu0 0.0
    %1191 = vmatprep.subr.mxu0 0.0
    %1192 = vmatpush1.msra.mxu0 0.0
    %1193 = vmatprep.subr.mxu0 0.0
    %1194 = vmatpush1.msra.mxu0 0.0
    %1195 = vmatprep.subr.mxu0 0.0
    %1196 = vmatpush1.msra.mxu0 0.0
    %1197 = vmatprep.subr.mxu0 0.0
    %1198 = vmatpush1.msra.mxu0 0.0
    %1199 = vmatprep.subr.mxu0 0.0
    %1200 = vmatpush1.msra.mxu0 0.0
    %1201 = vmatprep.subr.mxu0 0.0
    %1202 = vmatpush1.msra.mxu0 0.0
    %1203 = vmatprep.subr.mxu0 0.0
    %1204 = vmatpush1.msra.mxu0 0.0
    %1205 = vmatprep.subr.mxu0 0.0
    %1206 = vmatpush1.msra.mxu0 0.0
    %1207 = vmatprep.subr.mxu0 0.0
    %1208 = vmatpush1.msra.mxu0 0.0
    %1209 = vmatprep.subr.mxu0 0.0
    %1210 = vmatpush1.msra.mxu0 0.0
    %1211 = vmatprep.subr.mxu0 0.0
    %1212 = vmatpush1.msra.mxu0 0.0
    %1213 = vmatprep.subr.mxu0 0.0
    %1214 = vmatpush1.msra.mxu0 0.0
    %1215 = vmatprep.subr.mxu0 0.0
    %1216 = vmatpush1.msra.mxu0 0.0
    %1217 = vmatprep.subr.mxu0 0.0
    %1218 = vmatpush1.msra.mxu0 0.0
    %1219 = vmatprep.subr.mxu0 0.0
    %1220 = vmatpush1.msra.mxu0 0.0
    %1221 = vmatprep.subr.mxu0 0.0
    %1222 = vmatpush1.msra.mxu0 0.0
    %1223 = vmatprep.subr.mxu0 0.0
    %1224 = vmatpush1.msra.mxu0 0.0
    %1225 = vmatprep.subr.mxu0 0.0
    %1226 = vmatpush1.msra.mxu0 0.0
    %1227 = vmatprep.mubr.f32.mxu0 0.0
    %1228 = vmatmul.mubr.f32.gmra.mrb[0].mxu0 %v1158
    %v1229 = vpop.f32.mrb[0].mxu0
    %v1230 = vadd.f32 %v1149, %v1229
    %v1231 = vpop.f32.mrb[0].mxu0
    %1232 = vmatprep.mubr.f32.mxu0 0.0
    %1233 = vmatmul.mubr.f32.gmra.mrb[0].mxu0 %v1161
    %v1234 = vpop.f32.mrb[0].mxu0
    %v1235 = vadd.f32 %v1154, %v1234
    %v1236 = vpop.f32.mrb[0].mxu0
    %1237 = vdwg.mxu0
    %1238 = vrot.lane.b32.xlu0 %v212, 64
    %v1239 = vpop.permute.xlu0 %1238
    %1240 = vrot.lane.b32.xlu0 %v304, 64
    %v1241 = vpop.permute.xlu0 %1240
    %v1242 = vsel %vm410, %v1239, 0
    %v1244 = vsel %vm410, %v1241, 0
    %1246 = vmatprep.subr.mxu0 0.0
    %1247 = vmatpush1.xpose.msra.mxu0 %v1244
    %1248 = vmatprep.subr.mxu0 0.0
    %1249 = vmatpush1.xpose.msra.mxu0 0.0
    %1250 = vmatprep.subr.mxu0 0.0
    %1251 = vmatpush1.xpose.msra.mxu0 0.0
    %1252 = vmatprep.subr.mxu0 0.0
    %1253 = vmatpush1.xpose.msra.mxu0 0.0
    %1254 = vmatprep.subr.mxu0 0.0
    %1255 = vmatpush1.xpose.msra.mxu0 0.0
    %1256 = vmatprep.subr.mxu0 0.0
    %1257 = vmatpush1.xpose.msra.mxu0 0.0
    %1258 = vmatprep.subr.mxu0 0.0
    %1259 = vmatpush1.xpose.msra.mxu0 0.0
    %1260 = vmatprep.subr.mxu0 0.0
    %1261 = vmatpush1.xpose.msra.mxu0 0.0
    %1262 = vmatprep.subr.mxu0 0.0
    %1263 = vmatpush1.xpose.msra.mxu0 0.0
    %1264 = vmatprep.subr.mxu0 0.0
    %1265 = vmatpush1.xpose.msra.mxu0 0.0
    %1266 = vmatprep.subr.mxu0 0.0
    %1267 = vmatpush1.xpose.msra.mxu0 0.0
    %1268 = vmatprep.subr.mxu0 0.0
    %1269 = vmatpush1.xpose.msra.mxu0 0.0
    %1270 = vmatprep.subr.mxu0 0.0
    %1271 = vmatpush1.xpose.msra.mxu0 0.0
    %1272 = vmatprep.subr.mxu0 0.0
    %1273 = vmatpush1.xpose.msra.mxu0 0.0
    %1274 = vmatprep.subr.mxu0 0.0
    %1275 = vmatpush1.xpose.msra.mxu0 0.0
    %1276 = vmatprep.subr.mxu0 0.0
    %1277 = vmatpush1.xpose.msra.mxu0 0.0
    %1278 = vmatprep.subr.mxu0 0.0
    %1279 = vmatpush1.xpose.msra.mxu0 0.0
    %1280 = vmatprep.subr.mxu0 0.0
    %1281 = vmatpush1.xpose.msra.mxu0 0.0
    %1282 = vmatprep.subr.mxu0 0.0
    %1283 = vmatpush1.xpose.msra.mxu0 0.0
    %1284 = vmatprep.subr.mxu0 0.0
    %1285 = vmatpush1.xpose.msra.mxu0 0.0
    %1286 = vmatprep.subr.mxu0 0.0
    %1287 = vmatpush1.xpose.msra.mxu0 0.0
    %1288 = vmatprep.subr.mxu0 0.0
    %1289 = vmatpush1.xpose.msra.mxu0 0.0
    %1290 = vmatprep.subr.mxu0 0.0
    %1291 = vmatpush1.xpose.msra.mxu0 0.0
    %1292 = vmatprep.subr.mxu0 0.0
    %1293 = vmatpush1.xpose.msra.mxu0 0.0
    %1294 = vmatprep.subr.mxu0 0.0
    %1295 = vmatpush1.xpose.msra.mxu0 0.0
    %1296 = vmatprep.subr.mxu0 0.0
    %1297 = vmatpush1.xpose.msra.mxu0 0.0
    %1298 = vmatprep.subr.mxu0 0.0
    %1299 = vmatpush1.xpose.msra.mxu0 0.0
    %1300 = vmatprep.subr.mxu0 0.0
    %1301 = vmatpush1.xpose.msra.mxu0 0.0
    %1302 = vmatprep.subr.mxu0 0.0
    %1303 = vmatpush1.xpose.msra.mxu0 0.0
    %1304 = vmatprep.subr.mxu0 0.0
    %1305 = vmatpush1.xpose.msra.mxu0 0.0
    %1306 = vmatprep.subr.mxu0 0.0
    %1307 = vmatpush1.xpose.msra.mxu0 0.0
    %1308 = vmatprep.subr.mxu0 0.0
    %1309 = vmatpush1.xpose.msra.mxu0 0.0
    %1310 = vmatprep.mubr.f32.mxu0 0.0
    %1311 = vmatmul.mubr.f32.gmra.mrb[0].mxu0 %v1242
    %v1312 = vpop.f32.mrb[0].mxu0
    %v1313 = vadd.f32 0.0, %v1312
    %v1314 = vpop.f32.mrb[0].mxu0
    %1315 = vdwg.mxu0
    %1316 = vrot.lane.b32.xlu0 %v213, 64
    %v1317 = vpop.permute.xlu0 %1316
    %1318 = vrot.lane.b32.xlu0 %v309, 64
    %v1319 = vpop.permute.xlu0 %1318
    %v1320 = vsel %vm410, %v1317, 0
    %v1322 = vsel %vm410, %v1319, 0
    %1324 = vmatprep.subr.mxu0 0.0
    %1325 = vmatpush1.xpose.msra.mxu0 %v1322
    %1326 = vmatprep.subr.mxu0 0.0
    %1327 = vmatpush1.xpose.msra.mxu0 0.0
    %1328 = vmatprep.subr.mxu0 0.0
    %1329 = vmatpush1.xpose.msra.mxu0 0.0
    %1330 = vmatprep.subr.mxu0 0.0
    %1331 = vmatpush1.xpose.msra.mxu0 0.0
    %1332 = vmatprep.subr.mxu0 0.0
    %1333 = vmatpush1.xpose.msra.mxu0 0.0
    %1334 = vmatprep.subr.mxu0 0.0
    %1335 = vmatpush1.xpose.msra.mxu0 0.0
    %1336 = vmatprep.subr.mxu0 0.0
    %1337 = vmatpush1.xpose.msra.mxu0 0.0
    %1338 = vmatprep.subr.mxu0 0.0
    %1339 = vmatpush1.xpose.msra.mxu0 0.0
    %1340 = vmatprep.subr.mxu0 0.0
    %1341 = vmatpush1.xpose.msra.mxu0 0.0
    %1342 = vmatprep.subr.mxu0 0.0
    %1343 = vmatpush1.xpose.msra.mxu0 0.0
    %1344 = vmatprep.subr.mxu0 0.0
    %1345 = vmatpush1.xpose.msra.mxu0 0.0
    %1346 = vmatprep.subr.mxu0 0.0
    %1347 = vmatpush1.xpose.msra.mxu0 0.0
    %1348 = vmatprep.subr.mxu0 0.0
    %1349 = vmatpush1.xpose.msra.mxu0 0.0
    %1350 = vmatprep.subr.mxu0 0.0
    %1351 = vmatpush1.xpose.msra.mxu0 0.0
    %1352 = vmatprep.subr.mxu0 0.0
    %1353 = vmatpush1.xpose.msra.mxu0 0.0
    %1354 = vmatprep.subr.mxu0 0.0
    %1355 = vmatpush1.xpose.msra.mxu0 0.0
    %1356 = vmatprep.subr.mxu0 0.0
    %1357 = vmatpush1.xpose.msra.mxu0 0.0
    %1358 = vmatprep.subr.mxu0 0.0
    %1359 = vmatpush1.xpose.msra.mxu0 0.0
    %1360 = vmatprep.subr.mxu0 0.0
    %1361 = vmatpush1.xpose.msra.mxu0 0.0
    %1362 = vmatprep.subr.mxu0 0.0
    %1363 = vmatpush1.xpose.msra.mxu0 0.0
    %1364 = vmatprep.subr.mxu0 0.0
    %1365 = vmatpush1.xpose.msra.mxu0 0.0
    %1366 = vmatprep.subr.mxu0 0.0
    %1367 = vmatpush1.xpose.msra.mxu0 0.0
    %1368 = vmatprep.subr.mxu0 0.0
    %1369 = vmatpush1.xpose.msra.mxu0 0.0
    %1370 = vmatprep.subr.mxu0 0.0
    %1371 = vmatpush1.xpose.msra.mxu0 0.0
    %1372 = vmatprep.subr.mxu0 0.0
    %1373 = vmatpush1.xpose.msra.mxu0 0.0
    %1374 = vmatprep.subr.mxu0 0.0
    %1375 = vmatpush1.xpose.msra.mxu0 0.0
    %1376 = vmatprep.subr.mxu0 0.0
    %1377 = vmatpush1.xpose.msra.mxu0 0.0
    %1378 = vmatprep.subr.mxu0 0.0
    %1379 = vmatpush1.xpose.msra.mxu0 0.0
    %1380 = vmatprep.subr.mxu0 0.0
    %1381 = vmatpush1.xpose.msra.mxu0 0.0
    %1382 = vmatprep.subr.mxu0 0.0
    %1383 = vmatpush1.xpose.msra.mxu0 0.0
    %1384 = vmatprep.subr.mxu0 0.0
    %1385 = vmatpush1.xpose.msra.mxu0 0.0
    %1386 = vmatprep.subr.mxu0 0.0
    %1387 = vmatpush1.xpose.msra.mxu0 0.0
    %1388 = vmatprep.mubr.f32.mxu0 0.0
    %1389 = vmatmul.mubr.f32.gmra.mrb[0].mxu0 %v1320
    %v1390 = vpop.f32.mrb[0].mxu0
    %v1391 = vadd.f32 0.0, %v1390
    %v1392 = vpop.f32.mrb[0].mxu0
    %1393 = vdwg.mxu0
    %v1394 = vsel %vm563, %v1313, -inf
    %1395 = vmax.xlane.f32.xlu0 %v1394
    %v1396 = vpop.xlane.xlu0 %1395
    %v1397 = vsel %vm563, %v1391, -inf
    %1398 = vmax.xlane.f32.xlu0 %v1397
    %v1399 = vpop.xlane.xlu0 %1398
    %v1400 = vsub.f32 %v1313, %v1396
    %v1401 = vsub.f32 %v1391, %v1399
    %v1402 = vmul.f32 %v1400, 1.442695
    %v1403 = vpow.pop %v1402
    %v1404 = vmul.f32 %v1401, 1.442695
    %v1405 = vpow.pop %v1404
    %v1406 = vsel %vm563, %v1403, 0.0
    %1407 = vadd.xlane.f32.xlu0 %v1406
    %v1408 = vpop.xlane.xlu0 %1407
    %v1409 = vsel %vm563, %v1405, 0.0
    %1410 = vadd.xlane.f32.xlu0 %v1409
    %v1411 = vpop.xlane.xlu0 %1410
    %v1412 = vrcp.pop %v1408
    %v1413 = vmul.f32 %v1403, %v1412
    %v1414 = vrcp.pop %v1411
    %v1415 = vmul.f32 %v1405, %v1414
    %v1416 = vadd.f32 %v916, %v1413
    %v1417 = vadd.f32 %v917, %v1415
    %1418 = vrot.lane.b32.xlu0 %v402, 64
    %v1419 = vpop.permute.xlu0 %1418
    %v1422 = vsel %vm563, %v1413, 0
    %1424 = vmatprep.subr.mxu0 0.0
    %1425 = vmatpush1.msra.mxu0 %v1419
    %1426 = vmatprep.subr.mxu0 0.0
    %1427 = vmatpush1.msra.mxu0 0.0
    %1428 = vmatprep.subr.mxu0 0.0
    %1429 = vmatpush1.msra.mxu0 0.0
    %1430 = vmatprep.subr.mxu0 0.0
    %1431 = vmatpush1.msra.mxu0 0.0
    %1432 = vmatprep.subr.mxu0 0.0
    %1433 = vmatpush1.msra.mxu0 0.0
    %1434 = vmatprep.subr.mxu0 0.0
    %1435 = vmatpush1.msra.mxu0 0.0
    %1436 = vmatprep.subr.mxu0 0.0
    %1437 = vmatpush1.msra.mxu0 0.0
    %1438 = vmatprep.subr.mxu0 0.0
    %1439 = vmatpush1.msra.mxu0 0.0
    %1440 = vmatprep.subr.mxu0 0.0
    %1441 = vmatpush1.msra.mxu0 0.0
    %1442 = vmatprep.subr.mxu0 0.0
    %1443 = vmatpush1.msra.mxu0 0.0
    %1444 = vmatprep.subr.mxu0 0.0
    %1445 = vmatpush1.msra.mxu0 0.0
    %1446 = vmatprep.subr.mxu0 0.0
    %1447 = vmatpush1.msra.mxu0 0.0
    %1448 = vmatprep.subr.mxu0 0.0
    %1449 = vmatpush1.msra.mxu0 0.0
    %1450 = vmatprep.subr.mxu0 0.0
    %1451 = vmatpush1.msra.mxu0 0.0
    %1452 = vmatprep.subr.mxu0 0.0
    %1453 = vmatpush1.msra.mxu0 0.0
    %1454 = vmatprep.subr.mxu0 0.0
    %1455 = vmatpush1.msra.mxu0 0.0
    %1456 = vmatprep.subr.mxu0 0.0
    %1457 = vmatpush1.msra.mxu0 0.0
    %1458 = vmatprep.subr.mxu0 0.0
    %1459 = vmatpush1.msra.mxu0 0.0
    %1460 = vmatprep.subr.mxu0 0.0
    %1461 = vmatpush1.msra.mxu0 0.0
    %1462 = vmatprep.subr.mxu0 0.0
    %1463 = vmatpush1.msra.mxu0 0.0
    %1464 = vmatprep.subr.mxu0 0.0
    %1465 = vmatpush1.msra.mxu0 0.0
    %1466 = vmatprep.subr.mxu0 0.0
    %1467 = vmatpush1.msra.mxu0 0.0
    %1468 = vmatprep.subr.mxu0 0.0
    %1469 = vmatpush1.msra.mxu0 0.0
    %1470 = vmatprep.subr.mxu0 0.0
    %1471 = vmatpush1.msra.mxu0 0.0
    %1472 = vmatprep.subr.mxu0 0.0
    %1473 = vmatpush1.msra.mxu0 0.0
    %1474 = vmatprep.subr.mxu0 0.0
    %1475 = vmatpush1.msra.mxu0 0.0
    %1476 = vmatprep.subr.mxu0 0.0
    %1477 = vmatpush1.msra.mxu0 0.0
    %1478 = vmatprep.subr.mxu0 0.0
    %1479 = vmatpush1.msra.mxu0 0.0
    %1480 = vmatprep.subr.mxu0 0.0
    %1481 = vmatpush1.msra.mxu0 0.0
    %1482 = vmatprep.subr.mxu0 0.0
    %1483 = vmatpush1.msra.mxu0 0.0
    %1484 = vmatprep.subr.mxu0 0.0
    %1485 = vmatpush1.msra.mxu0 0.0
    %1486 = vmatprep.subr.mxu0 0.0
    %1487 = vmatpush1.msra.mxu0 0.0
    %1488 = vmatprep.mubr.f32.mxu0 0.0
    %1489 = vmatmul.mubr.f32.gmra.mrb[0].mxu0 %v1422
    %v1490 = vpop.f32.mrb[0].mxu0
    %v1491 = vadd.f32 0.0, %v1490
    %v1492 = vpop.f32.mrb[0].mxu0
    %1493 = vdwg.mxu0
    %1494 = vrot.lane.b32.xlu0 %v407, 64
    %v1495 = vpop.permute.xlu0 %1494
    %v1498 = vsel %vm563, %v1415, 0
    %1500 = vmatprep.subr.mxu0 0.0
    %1501 = vmatpush1.msra.mxu0 %v1495
    %1502 = vmatprep.subr.mxu0 0.0
    %1503 = vmatpush1.msra.mxu0 0.0
    %1504 = vmatprep.subr.mxu0 0.0
    %1505 = vmatpush1.msra.mxu0 0.0
    %1506 = vmatprep.subr.mxu0 0.0
    %1507 = vmatpush1.msra.mxu0 0.0
    %1508 = vmatprep.subr.mxu0 0.0
    %1509 = vmatpush1.msra.mxu0 0.0
    %1510 = vmatprep.subr.mxu0 0.0
    %1511 = vmatpush1.msra.mxu0 0.0
    %1512 = vmatprep.subr.mxu0 0.0
    %1513 = vmatpush1.msra.mxu0 0.0
    %1514 = vmatprep.subr.mxu0 0.0
    %1515 = vmatpush1.msra.mxu0 0.0
    %1516 = vmatprep.subr.mxu0 0.0
    %1517 = vmatpush1.msra.mxu0 0.0
    %1518 = vmatprep.subr.mxu0 0.0
    %1519 = vmatpush1.msra.mxu0 0.0
    %1520 = vmatprep.subr.mxu0 0.0
    %1521 = vmatpush1.msra.mxu0 0.0
    %1522 = vmatprep.subr.mxu0 0.0
    %1523 = vmatpush1.msra.mxu0 0.0
    %1524 = vmatprep.subr.mxu0 0.0
    %1525 = vmatpush1.msra.mxu0 0.0
    %1526 = vmatprep.subr.mxu0 0.0
    %1527 = vmatpush1.msra.mxu0 0.0
    %1528 = vmatprep.subr.mxu0 0.0
    %1529 = vmatpush1.msra.mxu0 0.0
    %1530 = vmatprep.subr.mxu0 0.0
    %1531 = vmatpush1.msra.mxu0 0.0
    %1532 = vmatprep.subr.mxu0 0.0
    %1533 = vmatpush1.msra.mxu0 0.0
    %1534 = vmatprep.subr.mxu0 0.0
    %1535 = vmatpush1.msra.mxu0 0.0
    %1536 = vmatprep.subr.mxu0 0.0
    %1537 = vmatpush1.msra.mxu0 0.0
    %1538 = vmatprep.subr.mxu0 0.0
    %1539 = vmatpush1.msra.mxu0 0.0
    %1540 = vmatprep.subr.mxu0 0.0
    %1541 = vmatpush1.msra.mxu0 0.0
    %1542 = vmatprep.subr.mxu0 0.0
    %1543 = vmatpush1.msra.mxu0 0.0
    %1544 = vmatprep.subr.mxu0 0.0
    %1545 = vmatpush1.msra.mxu0 0.0
    %1546 = vmatprep.subr.mxu0 0.0
    %1547 = vmatpush1.msra.mxu0 0.0
    %1548 = vmatprep.subr.mxu0 0.0
    %1549 = vmatpush1.msra.mxu0 0.0
    %1550 = vmatprep.subr.mxu0 0.0
    %1551 = vmatpush1.msra.mxu0 0.0
    %1552 = vmatprep.subr.mxu0 0.0
    %1553 = vmatpush1.msra.mxu0 0.0
    %1554 = vmatprep.subr.mxu0 0.0
    %1555 = vmatpush1.msra.mxu0 0.0
    %1556 = vmatprep.subr.mxu0 0.0
    %1557 = vmatpush1.msra.mxu0 0.0
    %1558 = vmatprep.subr.mxu0 0.0
    %1559 = vmatpush1.msra.mxu0 0.0
    %1560 = vmatprep.subr.mxu0 0.0
    %1561 = vmatpush1.msra.mxu0 0.0
    %1562 = vmatprep.subr.mxu0 0.0
    %1563 = vmatpush1.msra.mxu0 0.0
    %1564 = vmatprep.mubr.f32.mxu0 0.0
    %1565 = vmatmul.mubr.f32.gmra.mrb[0].mxu0 %v1498
    %v1566 = vpop.f32.mrb[0].mxu0
    %v1567 = vadd.f32 0.0, %v1566
    %v1568 = vpop.f32.mrb[0].mxu0
    %1569 = vdwg.mxu0
    %v1570 = vld [vmem:[#allocation11 + $0x40] sm:$0xff]
    %v1571 = vld [vmem:[#allocation11 + $0x48] sm:$0xff]
    %v1572 = vld [vmem:[#allocation11 + $0x50] sm:$0xff]
    %v1573 = vld [vmem:[#allocation11 + $0x58] sm:$0xff]
    %v1575 = vsel %vm410, %v1491, 0
    %v1578 = vsel %vm410, %v1567, 0
    %1580 = vmatprep.subr.mxu0 0.0
    %1581 = vmatpush1.msra.mxu0 %v1570
    %1582 = vmatprep.subr.mxu0 0.0
    %1583 = vmatpush1.msra.mxu0 %v1571
    %1584 = vmatprep.subr.mxu0 0.0
    %1585 = vmatpush1.msra.mxu0 %v1572
    %1586 = vmatprep.subr.mxu0 0.0
    %1587 = vmatpush1.msra.mxu0 %v1573
    %1588 = vmatprep.subr.mxu0 0.0
    %1589 = vmatpush1.msra.mxu0 0.0
    %1590 = vmatprep.subr.mxu0 0.0
    %1591 = vmatpush1.msra.mxu0 0.0
    %1592 = vmatprep.subr.mxu0 0.0
    %1593 = vmatpush1.msra.mxu0 0.0
    %1594 = vmatprep.subr.mxu0 0.0
    %1595 = vmatpush1.msra.mxu0 0.0
    %1596 = vmatprep.subr.mxu0 0.0
    %1597 = vmatpush1.msra.mxu0 0.0
    %1598 = vmatprep.subr.mxu0 0.0
    %1599 = vmatpush1.msra.mxu0 0.0
    %1600 = vmatprep.subr.mxu0 0.0
    %1601 = vmatpush1.msra.mxu0 0.0
    %1602 = vmatprep.subr.mxu0 0.0
    %1603 = vmatpush1.msra.mxu0 0.0
    %1604 = vmatprep.subr.mxu0 0.0
    %1605 = vmatpush1.msra.mxu0 0.0
    %1606 = vmatprep.subr.mxu0 0.0
    %1607 = vmatpush1.msra.mxu0 0.0
    %1608 = vmatprep.subr.mxu0 0.0
    %1609 = vmatpush1.msra.mxu0 0.0
    %1610 = vmatprep.subr.mxu0 0.0
    %1611 = vmatpush1.msra.mxu0 0.0
    %1612 = vmatprep.subr.mxu0 0.0
    %1613 = vmatpush1.msra.mxu0 0.0
    %1614 = vmatprep.subr.mxu0 0.0
    %1615 = vmatpush1.msra.mxu0 0.0
    %1616 = vmatprep.subr.mxu0 0.0
    %1617 = vmatpush1.msra.mxu0 0.0
    %1618 = vmatprep.subr.mxu0 0.0
    %1619 = vmatpush1.msra.mxu0 0.0
    %1620 = vmatprep.subr.mxu0 0.0
    %1621 = vmatpush1.msra.mxu0 0.0
    %1622 = vmatprep.subr.mxu0 0.0
    %1623 = vmatpush1.msra.mxu0 0.0
    %1624 = vmatprep.subr.mxu0 0.0
    %1625 = vmatpush1.msra.mxu0 0.0
    %1626 = vmatprep.subr.mxu0 0.0
    %1627 = vmatpush1.msra.mxu0 0.0
    %1628 = vmatprep.subr.mxu0 0.0
    %1629 = vmatpush1.msra.mxu0 0.0
    %1630 = vmatprep.subr.mxu0 0.0
    %1631 = vmatpush1.msra.mxu0 0.0
    %1632 = vmatprep.subr.mxu0 0.0
    %1633 = vmatpush1.msra.mxu0 0.0
    %1634 = vmatprep.subr.mxu0 0.0
    %1635 = vmatpush1.msra.mxu0 0.0
    %1636 = vmatprep.subr.mxu0 0.0
    %1637 = vmatpush1.msra.mxu0 0.0
    %1638 = vmatprep.subr.mxu0 0.0
    %1639 = vmatpush1.msra.mxu0 0.0
    %1640 = vmatprep.subr.mxu0 0.0
    %1641 = vmatpush1.msra.mxu0 0.0
    %1642 = vmatprep.subr.mxu0 0.0
    %1643 = vmatpush1.msra.mxu0 0.0
    %1644 = vmatprep.mubr.f32.mxu0 0.0
    %1645 = vmatmul.mubr.f32.gmra.mrb[0].mxu0 %v1575
    %v1646 = vpop.f32.mrb[0].mxu0
    %v1647 = vadd.f32 0.0, %v1646
    %v1648 = vpop.f32.mrb[0].mxu0
    %1649 = vmatprep.mubr.f32.mxu0 0.0
    %1650 = vmatmul.mubr.f32.gmra.mrb[0].mxu0 %v1578
    %v1651 = vpop.f32.mrb[0].mxu0
    %v1652 = vadd.f32 0.0, %v1651
    %v1653 = vpop.f32.mrb[0].mxu0
    %1654 = vdwg.mxu0
    %v1655 = vadd.f32 %v1230, %v1647
    %v1656 = vadd.f32 %v1235, %v1652
    %1657 = vrot.lane.b32.xlu0 %v212, 32
    %v1658 = vpop.permute.xlu0 %1657
    %1659 = vrot.lane.b32.xlu0 %v304, 32
    %v1660 = vpop.permute.xlu0 %1659
    %v1661 = vsel %vm410, %v1658, 0
    %v1663 = vsel %vm410, %v1660, 0
    %1665 = vmatprep.subr.mxu0 0.0
    %1666 = vmatpush1.xpose.msra.mxu0 %v1663
    %1667 = vmatprep.subr.mxu0 0.0
    %1668 = vmatpush1.xpose.msra.mxu0 0.0
    %1669 = vmatprep.subr.mxu0 0.0
    %1670 = vmatpush1.xpose.msra.mxu0 0.0
    %1671 = vmatprep.subr.mxu0 0.0
    %1672 = vmatpush1.xpose.msra.mxu0 0.0
    %1673 = vmatprep.subr.mxu0 0.0
    %1674 = vmatpush1.xpose.msra.mxu0 0.0
    %1675 = vmatprep.subr.mxu0 0.0
    %1676 = vmatpush1.xpose.msra.mxu0 0.0
    %1677 = vmatprep.subr.mxu0 0.0
    %1678 = vmatpush1.xpose.msra.mxu0 0.0
    %1679 = vmatprep.subr.mxu0 0.0
    %1680 = vmatpush1.xpose.msra.mxu0 0.0
    %1681 = vmatprep.subr.mxu0 0.0
    %1682 = vmatpush1.xpose.msra.mxu0 0.0
    %1683 = vmatprep.subr.mxu0 0.0
    %1684 = vmatpush1.xpose.msra.mxu0 0.0
    %1685 = vmatprep.subr.mxu0 0.0
    %1686 = vmatpush1.xpose.msra.mxu0 0.0
    %1687 = vmatprep.subr.mxu0 0.0
    %1688 = vmatpush1.xpose.msra.mxu0 0.0
    %1689 = vmatprep.subr.mxu0 0.0
    %1690 = vmatpush1.xpose.msra.mxu0 0.0
    %1691 = vmatprep.subr.mxu0 0.0
    %1692 = vmatpush1.xpose.msra.mxu0 0.0
    %1693 = vmatprep.subr.mxu0 0.0
    %1694 = vmatpush1.xpose.msra.mxu0 0.0
    %1695 = vmatprep.subr.mxu0 0.0
    %1696 = vmatpush1.xpose.msra.mxu0 0.0
    %1697 = vmatprep.subr.mxu0 0.0
    %1698 = vmatpush1.xpose.msra.mxu0 0.0
    %1699 = vmatprep.subr.mxu0 0.0
    %1700 = vmatpush1.xpose.msra.mxu0 0.0
    %1701 = vmatprep.subr.mxu0 0.0
    %1702 = vmatpush1.xpose.msra.mxu0 0.0
    %1703 = vmatprep.subr.mxu0 0.0
    %1704 = vmatpush1.xpose.msra.mxu0 0.0
    %1705 = vmatprep.subr.mxu0 0.0
    %1706 = vmatpush1.xpose.msra.mxu0 0.0
    %1707 = vmatprep.subr.mxu0 0.0
    %1708 = vmatpush1.xpose.msra.mxu0 0.0
    %1709 = vmatprep.subr.mxu0 0.0
    %1710 = vmatpush1.xpose.msra.mxu0 0.0
    %1711 = vmatprep.subr.mxu0 0.0
    %1712 = vmatpush1.xpose.msra.mxu0 0.0
    %1713 = vmatprep.subr.mxu0 0.0
    %1714 = vmatpush1.xpose.msra.mxu0 0.0
    %1715 = vmatprep.subr.mxu0 0.0
    %1716 = vmatpush1.xpose.msra.mxu0 0.0
    %1717 = vmatprep.subr.mxu0 0.0
    %1718 = vmatpush1.xpose.msra.mxu0 0.0
    %1719 = vmatprep.subr.mxu0 0.0
    %1720 = vmatpush1.xpose.msra.mxu0 0.0
    %1721 = vmatprep.subr.mxu0 0.0
    %1722 = vmatpush1.xpose.msra.mxu0 0.0
    %1723 = vmatprep.subr.mxu0 0.0
    %1724 = vmatpush1.xpose.msra.mxu0 0.0
    %1725 = vmatprep.subr.mxu0 0.0
    %1726 = vmatpush1.xpose.msra.mxu0 0.0
    %1727 = vmatprep.subr.mxu0 0.0
    %1728 = vmatpush1.xpose.msra.mxu0 0.0
    %1729 = vmatprep.mubr.f32.mxu0 0.0
    %1730 = vmatmul.mubr.f32.gmra.mrb[0].mxu0 %v1661
    %v1731 = vpop.f32.mrb[0].mxu0
    %v1732 = vadd.f32 0.0, %v1731
    %v1733 = vpop.f32.mrb[0].mxu0
    %1734 = vdwg.mxu0
    %1735 = vrot.lane.b32.xlu0 %v213, 32
    %v1736 = vpop.permute.xlu0 %1735
    %1737 = vrot.lane.b32.xlu0 %v309, 32
    %v1738 = vpop.permute.xlu0 %1737
    %v1739 = vsel %vm410, %v1736, 0
    %v1741 = vsel %vm410, %v1738, 0
    %1743 = vmatprep.subr.mxu0 0.0
    %1744 = vmatpush1.xpose.msra.mxu0 %v1741
    %1745 = vmatprep.subr.mxu0 0.0
    %1746 = vmatpush1.xpose.msra.mxu0 0.0
    %1747 = vmatprep.subr.mxu0 0.0
    %1748 = vmatpush1.xpose.msra.mxu0 0.0
    %1749 = vmatprep.subr.mxu0 0.0
    %1750 = vmatpush1.xpose.msra.mxu0 0.0
    %1751 = vmatprep.subr.mxu0 0.0
    %1752 = vmatpush1.xpose.msra.mxu0 0.0
    %1753 = vmatprep.subr.mxu0 0.0
    %1754 = vmatpush1.xpose.msra.mxu0 0.0
    %1755 = vmatprep.subr.mxu0 0.0
    %1756 = vmatpush1.xpose.msra.mxu0 0.0
    %1757 = vmatprep.subr.mxu0 0.0
    %1758 = vmatpush1.xpose.msra.mxu0 0.0
    %1759 = vmatprep.subr.mxu0 0.0
    %1760 = vmatpush1.xpose.msra.mxu0 0.0
    %1761 = vmatprep.subr.mxu0 0.0
    %1762 = vmatpush1.xpose.msra.mxu0 0.0
    %1763 = vmatprep.subr.mxu0 0.0
    %1764 = vmatpush1.xpose.msra.mxu0 0.0
    %1765 = vmatprep.subr.mxu0 0.0
    %1766 = vmatpush1.xpose.msra.mxu0 0.0
    %1767 = vmatprep.subr.mxu0 0.0
    %1768 = vmatpush1.xpose.msra.mxu0 0.0
    %1769 = vmatprep.subr.mxu0 0.0
    %1770 = vmatpush1.xpose.msra.mxu0 0.0
    %1771 = vmatprep.subr.mxu0 0.0
    %1772 = vmatpush1.xpose.msra.mxu0 0.0
    %1773 = vmatprep.subr.mxu0 0.0
    %1774 = vmatpush1.xpose.msra.mxu0 0.0
    %1775 = vmatprep.subr.mxu0 0.0
    %1776 = vmatpush1.xpose.msra.mxu0 0.0
    %1777 = vmatprep.subr.mxu0 0.0
    %1778 = vmatpush1.xpose.msra.mxu0 0.0
    %1779 = vmatprep.subr.mxu0 0.0
    %1780 = vmatpush1.xpose.msra.mxu0 0.0
    %1781 = vmatprep.subr.mxu0 0.0
    %1782 = vmatpush1.xpose.msra.mxu0 0.0
    %1783 = vmatprep.subr.mxu0 0.0
    %1784 = vmatpush1.xpose.msra.mxu0 0.0
    %1785 = vmatprep.subr.mxu0 0.0
    %1786 = vmatpush1.xpose.msra.mxu0 0.0
    %1787 = vmatprep.subr.mxu0 0.0
    %1788 = vmatpush1.xpose.msra.mxu0 0.0
    %1789 = vmatprep.subr.mxu0 0.0
    %1790 = vmatpush1.xpose.msra.mxu0 0.0
    %1791 = vmatprep.subr.mxu0 0.0
    %1792 = vmatpush1.xpose.msra.mxu0 0.0
    %1793 = vmatprep.subr.mxu0 0.0
    %1794 = vmatpush1.xpose.msra.mxu0 0.0
    %1795 = vmatprep.subr.mxu0 0.0
    %1796 = vmatpush1.xpose.msra.mxu0 0.0
    %1797 = vmatprep.subr.mxu0 0.0
    %1798 = vmatpush1.xpose.msra.mxu0 0.0
    %1799 = vmatprep.subr.mxu0 0.0
    %1800 = vmatpush1.xpose.msra.mxu0 0.0
    %1801 = vmatprep.subr.mxu0 0.0
    %1802 = vmatpush1.xpose.msra.mxu0 0.0
    %1803 = vmatprep.subr.mxu0 0.0
    %1804 = vmatpush1.xpose.msra.mxu0 0.0
    %1805 = vmatprep.subr.mxu0 0.0
    %1806 = vmatpush1.xpose.msra.mxu0 0.0
    %1807 = vmatprep.mubr.f32.mxu0 0.0
    %1808 = vmatmul.mubr.f32.gmra.mrb[0].mxu0 %v1739
    %v1809 = vpop.f32.mrb[0].mxu0
    %v1810 = vadd.f32 0.0, %v1809
    %v1811 = vpop.f32.mrb[0].mxu0
    %1812 = vdwg.mxu0
    %v1813 = vsel %vm563, %v1732, -inf
    %1814 = vmax.xlane.f32.xlu0 %v1813
    %v1815 = vpop.xlane.xlu0 %1814
    %v1816 = vsel %vm563, %v1810, -inf
    %1817 = vmax.xlane.f32.xlu0 %v1816
    %v1818 = vpop.xlane.xlu0 %1817
    %v1819 = vsub.f32 %v1732, %v1815
    %v1820 = vsub.f32 %v1810, %v1818
    %v1821 = vmul.f32 %v1819, 1.442695
    %v1822 = vpow.pop %v1821
    %v1823 = vmul.f32 %v1820, 1.442695
    %v1824 = vpow.pop %v1823
    %v1825 = vsel %vm563, %v1822, 0.0
    %1826 = vadd.xlane.f32.xlu0 %v1825
    %v1827 = vpop.xlane.xlu0 %1826
    %v1828 = vsel %vm563, %v1824, 0.0
    %1829 = vadd.xlane.f32.xlu0 %v1828
    %v1830 = vpop.xlane.xlu0 %1829
    %v1831 = vrcp.pop %v1827
    %v1832 = vmul.f32 %v1822, %v1831
    %v1833 = vrcp.pop %v1830
    %v1834 = vmul.f32 %v1824, %v1833
    %v1835 = vadd.f32 %v1416, %v1832
    %v1836 = vadd.f32 %v1417, %v1834
    %1837 = vrot.lane.b32.xlu0 %v402, 32
    %v1838 = vpop.permute.xlu0 %1837
    %v1841 = vsel %vm563, %v1832, 0
    %1843 = vmatprep.subr.mxu0 0.0
    %1844 = vmatpush1.msra.mxu0 %v1838
    %1845 = vmatprep.subr.mxu0 0.0
    %1846 = vmatpush1.msra.mxu0 0.0
    %1847 = vmatprep.subr.mxu0 0.0
    %1848 = vmatpush1.msra.mxu0 0.0
    %1849 = vmatprep.subr.mxu0 0.0
    %1850 = vmatpush1.msra.mxu0 0.0
    %1851 = vmatprep.subr.mxu0 0.0
    %1852 = vmatpush1.msra.mxu0 0.0
    %1853 = vmatprep.subr.mxu0 0.0
    %1854 = vmatpush1.msra.mxu0 0.0
    %1855 = vmatprep.subr.mxu0 0.0
    %1856 = vmatpush1.msra.mxu0 0.0
    %1857 = vmatprep.subr.mxu0 0.0
    %1858 = vmatpush1.msra.mxu0 0.0
    %1859 = vmatprep.subr.mxu0 0.0
    %1860 = vmatpush1.msra.mxu0 0.0
    %1861 = vmatprep.subr.mxu0 0.0
    %1862 = vmatpush1.msra.mxu0 0.0
    %1863 = vmatprep.subr.mxu0 0.0
    %1864 = vmatpush1.msra.mxu0 0.0
    %1865 = vmatprep.subr.mxu0 0.0
    %1866 = vmatpush1.msra.mxu0 0.0
    %1867 = vmatprep.subr.mxu0 0.0
    %1868 = vmatpush1.msra.mxu0 0.0
    %1869 = vmatprep.subr.mxu0 0.0
    %1870 = vmatpush1.msra.mxu0 0.0
    %1871 = vmatprep.subr.mxu0 0.0
    %1872 = vmatpush1.msra.mxu0 0.0
    %1873 = vmatprep.subr.mxu0 0.0
    %1874 = vmatpush1.msra.mxu0 0.0
    %1875 = vmatprep.subr.mxu0 0.0
    %1876 = vmatpush1.msra.mxu0 0.0
    %1877 = vmatprep.subr.mxu0 0.0
    %1878 = vmatpush1.msra.mxu0 0.0
    %1879 = vmatprep.subr.mxu0 0.0
    %1880 = vmatpush1.msra.mxu0 0.0
    %1881 = vmatprep.subr.mxu0 0.0
    %1882 = vmatpush1.msra.mxu0 0.0
    %1883 = vmatprep.subr.mxu0 0.0
    %1884 = vmatpush1.msra.mxu0 0.0
    %1885 = vmatprep.subr.mxu0 0.0
    %1886 = vmatpush1.msra.mxu0 0.0
    %1887 = vmatprep.subr.mxu0 0.0
    %1888 = vmatpush1.msra.mxu0 0.0
    %1889 = vmatprep.subr.mxu0 0.0
    %1890 = vmatpush1.msra.mxu0 0.0
    %1891 = vmatprep.subr.mxu0 0.0
    %1892 = vmatpush1.msra.mxu0 0.0
    %1893 = vmatprep.subr.mxu0 0.0
    %1894 = vmatpush1.msra.mxu0 0.0
    %1895 = vmatprep.subr.mxu0 0.0
    %1896 = vmatpush1.msra.mxu0 0.0
    %1897 = vmatprep.subr.mxu0 0.0
    %1898 = vmatpush1.msra.mxu0 0.0
    %1899 = vmatprep.subr.mxu0 0.0
    %1900 = vmatpush1.msra.mxu0 0.0
    %1901 = vmatprep.subr.mxu0 0.0
    %1902 = vmatpush1.msra.mxu0 0.0
    %1903 = vmatprep.subr.mxu0 0.0
    %1904 = vmatpush1.msra.mxu0 0.0
    %1905 = vmatprep.subr.mxu0 0.0
    %1906 = vmatpush1.msra.mxu0 0.0
    %1907 = vmatprep.mubr.f32.mxu0 0.0
    %1908 = vmatmul.mubr.f32.gmra.mrb[0].mxu0 %v1841
    %v1909 = vpop.f32.mrb[0].mxu0
    %v1910 = vadd.f32 0.0, %v1909
    %v1911 = vpop.f32.mrb[0].mxu0
    %1912 = vdwg.mxu0
    %1913 = vrot.lane.b32.xlu0 %v407, 32
    %v1914 = vpop.permute.xlu0 %1913
    %v1917 = vsel %vm563, %v1834, 0
    %1919 = vmatprep.subr.mxu0 0.0
    %1920 = vmatpush1.msra.mxu0 %v1914
    %1921 = vmatprep.subr.mxu0 0.0
    %1922 = vmatpush1.msra.mxu0 0.0
    %1923 = vmatprep.subr.mxu0 0.0
    %1924 = vmatpush1.msra.mxu0 0.0
    %1925 = vmatprep.subr.mxu0 0.0
    %1926 = vmatpush1.msra.mxu0 0.0
    %1927 = vmatprep.subr.mxu0 0.0
    %1928 = vmatpush1.msra.mxu0 0.0
    %1929 = vmatprep.subr.mxu0 0.0
    %1930 = vmatpush1.msra.mxu0 0.0
    %1931 = vmatprep.subr.mxu0 0.0
    %1932 = vmatpush1.msra.mxu0 0.0
    %1933 = vmatprep.subr.mxu0 0.0
    %1934 = vmatpush1.msra.mxu0 0.0
    %1935 = vmatprep.subr.mxu0 0.0
    %1936 = vmatpush1.msra.mxu0 0.0
    %1937 = vmatprep.subr.mxu0 0.0
    %1938 = vmatpush1.msra.mxu0 0.0
    %1939 = vmatprep.subr.mxu0 0.0
    %1940 = vmatpush1.msra.mxu0 0.0
    %1941 = vmatprep.subr.mxu0 0.0
    %1942 = vmatpush1.msra.mxu0 0.0
    %1943 = vmatprep.subr.mxu0 0.0
    %1944 = vmatpush1.msra.mxu0 0.0
    %1945 = vmatprep.subr.mxu0 0.0
    %1946 = vmatpush1.msra.mxu0 0.0
    %1947 = vmatprep.subr.mxu0 0.0
    %1948 = vmatpush1.msra.mxu0 0.0
    %1949 = vmatprep.subr.mxu0 0.0
    %1950 = vmatpush1.msra.mxu0 0.0
    %1951 = vmatprep.subr.mxu0 0.0
    %1952 = vmatpush1.msra.mxu0 0.0
    %1953 = vmatprep.subr.mxu0 0.0
    %1954 = vmatpush1.msra.mxu0 0.0
    %1955 = vmatprep.subr.mxu0 0.0
    %1956 = vmatpush1.msra.mxu0 0.0
    %1957 = vmatprep.subr.mxu0 0.0
    %1958 = vmatpush1.msra.mxu0 0.0
    %1959 = vmatprep.subr.mxu0 0.0
    %1960 = vmatpush1.msra.mxu0 0.0
    %1961 = vmatprep.subr.mxu0 0.0
    %1962 = vmatpush1.msra.mxu0 0.0
    %1963 = vmatprep.subr.mxu0 0.0
    %1964 = vmatpush1.msra.mxu0 0.0
    %1965 = vmatprep.subr.mxu0 0.0
    %1966 = vmatpush1.msra.mxu0 0.0
    %1967 = vmatprep.subr.mxu0 0.0
    %1968 = vmatpush1.msra.mxu0 0.0
    %1969 = vmatprep.subr.mxu0 0.0
    %1970 = vmatpush1.msra.mxu0 0.0
    %1971 = vmatprep.subr.mxu0 0.0
    %1972 = vmatpush1.msra.mxu0 0.0
    %1973 = vmatprep.subr.mxu0 0.0
    %1974 = vmatpush1.msra.mxu0 0.0
    %1975 = vmatprep.subr.mxu0 0.0
    %1976 = vmatpush1.msra.mxu0 0.0
    %1977 = vmatprep.subr.mxu0 0.0
    %1978 = vmatpush1.msra.mxu0 0.0
    %1979 = vmatprep.subr.mxu0 0.0
    %1980 = vmatpush1.msra.mxu0 0.0
    %1981 = vmatprep.subr.mxu0 0.0
    %1982 = vmatpush1.msra.mxu0 0.0
    %1983 = vmatprep.mubr.f32.mxu0 0.0
    %1984 = vmatmul.mubr.f32.gmra.mrb[0].mxu0 %v1917
    %v1985 = vpop.f32.mrb[0].mxu0
    %v1986 = vadd.f32 0.0, %v1985
    %v1987 = vpop.f32.mrb[0].mxu0
    %1988 = vdwg.mxu0
    %v1989 = vld [vmem:[#allocation11 + $0x60] sm:$0xff]
    %v1990 = vld [vmem:[#allocation11 + $0x68] sm:$0xff]
    %v1991 = vld [vmem:[#allocation11 + $0x70] sm:$0xff]
    %v1992 = vld [vmem:[#allocation11 + $0x78] sm:$0xff]
    %v1994 = vsel %vm410, %v1910, 0
    %v1997 = vsel %vm410, %v1986, 0
    %1999 = vmatprep.subr.mxu0 0.0
    %2000 = vmatpush1.msra.mxu0 %v1989
    %2001 = vmatprep.subr.mxu0 0.0
    %2002 = vmatpush1.msra.mxu0 %v1990
    %2003 = vmatprep.subr.mxu0 0.0
    %2004 = vmatpush1.msra.mxu0 %v1991
    %2005 = vmatprep.subr.mxu0 0.0
    %2006 = vmatpush1.msra.mxu0 %v1992
    %2007 = vmatprep.subr.mxu0 0.0
    %2008 = vmatpush1.msra.mxu0 0.0
    %2009 = vmatprep.subr.mxu0 0.0
    %2010 = vmatpush1.msra.mxu0 0.0
    %2011 = vmatprep.subr.mxu0 0.0
    %2012 = vmatpush1.msra.mxu0 0.0
    %2013 = vmatprep.subr.mxu0 0.0
    %2014 = vmatpush1.msra.mxu0 0.0
    %2015 = vmatprep.subr.mxu0 0.0
    %2016 = vmatpush1.msra.mxu0 0.0
    %2017 = vmatprep.subr.mxu0 0.0
    %2018 = vmatpush1.msra.mxu0 0.0
    %2019 = vmatprep.subr.mxu0 0.0
    %2020 = vmatpush1.msra.mxu0 0.0
    %2021 = vmatprep.subr.mxu0 0.0
    %2022 = vmatpush1.msra.mxu0 0.0
    %2023 = vmatprep.subr.mxu0 0.0
    %2024 = vmatpush1.msra.mxu0 0.0
    %2025 = vmatprep.subr.mxu0 0.0
    %2026 = vmatpush1.msra.mxu0 0.0
    %2027 = vmatprep.subr.mxu0 0.0
    %2028 = vmatpush1.msra.mxu0 0.0
    %2029 = vmatprep.subr.mxu0 0.0
    %2030 = vmatpush1.msra.mxu0 0.0
    %2031 = vmatprep.subr.mxu0 0.0
    %2032 = vmatpush1.msra.mxu0 0.0
    %2033 = vmatprep.subr.mxu0 0.0
    %2034 = vmatpush1.msra.mxu0 0.0
    %2035 = vmatprep.subr.mxu0 0.0
    %2036 = vmatpush1.msra.mxu0 0.0
    %2037 = vmatprep.subr.mxu0 0.0
    %2038 = vmatpush1.msra.mxu0 0.0
    %2039 = vmatprep.subr.mxu0 0.0
    %2040 = vmatpush1.msra.mxu0 0.0
    %2041 = vmatprep.subr.mxu0 0.0
    %2042 = vmatpush1.msra.mxu0 0.0
    %2043 = vmatprep.subr.mxu0 0.0
    %2044 = vmatpush1.msra.mxu0 0.0
    %2045 = vmatprep.subr.mxu0 0.0
    %2046 = vmatpush1.msra.mxu0 0.0
    %2047 = vmatprep.subr.mxu0 0.0
    %2048 = vmatpush1.msra.mxu0 0.0
    %2049 = vmatprep.subr.mxu0 0.0
    %2050 = vmatpush1.msra.mxu0 0.0
    %2051 = vmatprep.subr.mxu0 0.0
    %2052 = vmatpush1.msra.mxu0 0.0
    %2053 = vmatprep.subr.mxu0 0.0
    %2054 = vmatpush1.msra.mxu0 0.0
    %2055 = vmatprep.subr.mxu0 0.0
    %2056 = vmatpush1.msra.mxu0 0.0
    %2057 = vmatprep.subr.mxu0 0.0
    %2058 = vmatpush1.msra.mxu0 0.0
    %2059 = vmatprep.subr.mxu0 0.0
    %2060 = vmatpush1.msra.mxu0 0.0
    %2061 = vmatprep.subr.mxu0 0.0
    %2062 = vmatpush1.msra.mxu0 0.0
    %2063 = vmatprep.mubr.f32.mxu0 0.0
    %2064 = vmatmul.mubr.f32.gmra.mrb[0].mxu0 %v1994
    %v2065 = vpop.f32.mrb[0].mxu0
    %v2066 = vadd.f32 0.0, %v2065
    %v2067 = vpop.f32.mrb[0].mxu0
    %2068 = vmatprep.mubr.f32.mxu0 0.0
    %2069 = vmatmul.mubr.f32.gmra.mrb[0].mxu0 %v1997
    %v2070 = vpop.f32.mrb[0].mxu0
    %v2071 = vadd.f32 0.0, %v2070
    %v2072 = vpop.f32.mrb[0].mxu0
    %2073 = vdwg.mxu0
    %v2074 = vadd.f32 %v1655, %v2066
    %v2075 = vadd.f32 %v1656, %v2071
    %v2076 = vld [vmem:[%s8] sm:$0x1]
    %v2078 = vlaneseq
    %v2079 = vshrl.u32 %v2078, 7
    %v2080 = vsub.s32 0, %v2079
    %v2081 = vrot.slane %v2076, %v2080
    %v2083 = vadd.f32 %v2074, %v2081
    %v2084 = vadd.f32 %v2075, %v2081
    %v2085 = vld [vmem:[%s9] sm:$0x1]
    %v2087 = vlaneseq
    %v2088 = vshrl.u32 %v2087, 7
    %v2089 = vsub.s32 0, %v2088
    %v2090 = vrot.slane %v2085, %v2089
    %v2092 = vmul.f32 %v2083, %v2090
    %v2093 = vmul.f32 %v2084, %v2090
    %2094 = vadd.xlane.f32.xlu0 %v2092
    %v2095 = vpop.xlane.xlu0 %2094
    %2096 = vadd.xlane.f32.xlu0 %v2093
    %v2097 = vpop.xlane.xlu0 %2096
    %v2098 = vld [vmem:[#allocation2] sm:$0x1]
    %v2100 = vlaneseq
    %v2101 = vshrl.u32 %v2100, 7
    %v2102 = vsub.s32 0, %v2101
    %v2103 = vrot.slane %v2098, %v2102
    %v2105 = vadd.f32 %v2095, %v2103
    %v2106 = vadd.f32 %v2097, %v2103
    %v2107 = vxor.u32 %v2105, 2147483648
    %v2108 = vxor.u32 %v2106, 2147483648
    %v2109 = vmul.f32 %v2107, 1.442695
    %v2110 = vpow.pop %v2109
    %v2111 = vmul.f32 %v2108, 1.442695
    %v2112 = vpow.pop %v2111
    %v2113 = vadd.f32 %v2110, 1.0
    %v2114 = vadd.f32 %v2112, 1.0
    %v2115 = vrcp.pop %v2113
    %v2116 = vmul.f32 1.0, %v2115
    %v2117 = vrcp.pop %v2114
    %v2118 = vmul.f32 1.0, %v2117
    %2121 = vset.pattern.permute.xlu0 0
    %2122 = vperm.xlu0 %2121, %v2116
    %v2123 = vpop.permute.xlu0 %2122
    %2124 = vset.pattern.permute.xlu0 0
    %2125 = vperm.xlu0 %2124, %v2118
    %v2126 = vpop.permute.xlu0 %2125
    %v2127 = vlaneseq
    %v2128 = vand.u32 %v2127, 127
    %v2129 = vlaneseq
    %v2130 = vshrl.u32 %v2129, 7
    %v2131 = vsub.s32 %v2128, %v2130
    %v2132 = vrot.slane %v2123, %v2131
    %v2133 = vlaneseq
    %v2134 = vshrl.u32 %v2133, 7
    %v2135 = vsub.s32 %v2128, %v2134
    %v2136 = vrot.slane %v2126, %v2135
    %vm2137 = vcmask 1041409
    %v2138 = vsel %vm2137, %v2136, %v2132
    %vm2140 = vcmask 58368
    %2141 = vst.msk [vmem:[#allocation12] sm:$0x3] %vm2140, %v2138
    %v2142 = vmul.f32 %v1835, 0.25
    %v2143 = vmul.f32 %v1836, 0.25
    %v2144 = vcombine.high %v2142, 0.0
    %v2146 = vunpack.c.l.s4 1983009808
    %v2147 = vunpack.c.0.s8 %v2146
    %v2148 = vlaneseq
    %v2149 = vshrl.u32 %v2148, 7
    %v2150 = vsub.s32 %v2147, %v2149
    %v2151 = vrot.slane %v2142, %v2150
    %v2153 = vunpack.c.l.s4 1983009808
    %v2154 = vunpack.c.0.s8 %v2153
    %v2155 = vlaneseq
    %v2156 = vshrl.u32 %v2155, 7
    %v2157 = vsub.s32 %v2154, %v2156
    %v2158 = vrot.slane %v2144, %v2157
    %v2159 = vcombine.high %v2143, 0.0
    %v2161 = vunpack.c.l.s4 1983009808
    %v2162 = vunpack.c.0.s8 %v2161
    %v2163 = vlaneseq
    %v2164 = vshrl.u32 %v2163, 7
    %v2165 = vsub.s32 %v2162, %v2164
    %v2166 = vrot.slane %v2143, %v2165
    %v2168 = vunpack.c.l.s4 1983009808
    %v2169 = vunpack.c.0.s8 %v2168
    %v2170 = vlaneseq
    %v2171 = vshrl.u32 %v2170, 7
    %v2172 = vsub.s32 %v2169, %v2171
    %v2173 = vrot.slane %v2159, %v2172
    %v2174 = vcombine.low %v2151, %v2166
    %v2175 = vcombine.high %v2151, %v2166
    %v2177 = vunpack.c.l.s4 1934713408
    %v2178 = vunpack.c.0.s8 %v2177
    %v2179 = vlaneseq
    %v2180 = vshrl.u32 %v2179, 7
    %v2181 = vsub.s32 %v2178, %v2180
    %v2182 = vrot.slane %v2174, %v2181
    %v2184 = vunpack.c.l.s4 1934713408
    %v2185 = vunpack.c.0.s8 %v2184
    %v2186 = vlaneseq
    %v2187 = vshrl.u32 %v2186, 7
    %v2188 = vsub.s32 %v2185, %v2187
    %v2189 = vrot.slane %v2175, %v2188
    %v2190 = vcombine.low %v2158, %v2173
    %v2191 = vcombine.high %v2158, %v2173
    %v2193 = vunpack.c.l.s4 1934713408
    %v2194 = vunpack.c.0.s8 %v2193
    %v2195 = vlaneseq
    %v2196 = vshrl.u32 %v2195, 7
    %v2197 = vsub.s32 %v2194, %v2196
    %v2198 = vrot.slane %v2190, %v2197
    %v2200 = vunpack.c.l.s4 1934713408
    %v2201 = vunpack.c.0.s8 %v2200
    %v2202 = vlaneseq
    %v2203 = vshrl.u32 %v2202, 7
    %v2204 = vsub.s32 %v2201, %v2203
    %v2205 = vrot.slane %v2191, %v2204
    %v2206 = vcombine.high %v2182, 0.0
    %v2207 = vcombine.high %v2189, 0.0
    %v2208 = vcombine.high %v2198, 0.0
    %v2209 = vcombine.high %v2205, 0.0
    %2211 = vrot.lane.b32.xlu0 %v2206, 8
    %v2212 = vpop.permute.xlu0 %2211
    %2215 = vrot.lane.b32.xlu0 %v2189, 16
    %v2216 = vpop.permute.xlu0 %2215
    %2219 = vrot.lane.b32.xlu0 %v2207, 24
    %v2220 = vpop.permute.xlu0 %2219
    %2223 = vrot.lane.b32.xlu0 %v2198, 32
    %v2224 = vpop.permute.xlu0 %2223
    %2227 = vrot.lane.b32.xlu0 %v2208, 40
    %v2228 = vpop.permute.xlu0 %2227
    %2231 = vrot.lane.b32.xlu0 %v2205, 48
    %v2232 = vpop.permute.xlu0 %2231
    %2235 = vrot.lane.b32.xlu0 %v2209, 56
    %v2236 = vpop.permute.xlu0 %2235
    %v2238 = vsel %vm563, %v2182, %v2212
    %vm2239 = vcmask 130048
    %v2240 = vsel %vm2239, %v2238, %v2216
    %vm2241 = vcmask 195584
    %v2242 = vsel %vm2241, %v2240, %v2220
    %v2243 = vsel %vm410, %v2242, %v2224
    %vm2244 = vcmask 326656
    %v2245 = vsel %vm2244, %v2243, %v2228
    %vm2246 = vcmask 392192
    %v2247 = vsel %vm2246, %v2245, %v2232
    %vm2248 = vcmask 457728
    %v2249 = vsel %vm2248, %v2247, %v2236
    %vm2250 = vcmask 517120
    %2251 = vst.msk [vmem:[#allocation13] sm:$0x3] %vm2250, %v2249
    // Predicated region
    $region66: #{tpu_custom_call.1} parent=1 // pred_check
      _
    $region67: #{tpu_custom_call.1} parent=1 // pred_check_branch
      %2253 = sbr.rel (0) target = $region69
    $region68: #{tpu_custom_call.1} parent=1 // pred_region
      %s2255 = ssub.s32 32, 32
      %2256 = vsyncadd [#allocation5], %s2255
      %s2258 = sshll.u32 [#allocation12], 4
      %s2259 = int_to_ptr.vmem [resolvable:$true] %s2258
      %2261 = dma.vmem_to_hbm [thread:$0]  %s2259, 32, %s11, [#allocation5]
    $region69: #{tpu_custom_call.1} parent=1 // pred_fallthru
      _
    // Predicated region
    $region70: #{tpu_custom_call.1} parent=1 // pred_check
      _
    $region71: #{tpu_custom_call.1} parent=1 // pred_check_branch
      %2263 = sbr.rel (0) target = $region73
    $region72: #{tpu_custom_call.1} parent=1 // pred_region
      %s2265 = ssub.s32 32, 32
      %2266 = vsyncadd [#allocation14], %s2265
      %s2268 = sshll.u32 [#allocation13], 4
      %s2269 = int_to_ptr.vmem [resolvable:$true] %s2268
      %2271 = dma.vmem_to_hbm [thread:$0]  %s2269, 32, %s12, [#allocation14]
    $region73: #{tpu_custom_call.1} parent=1 // pred_fallthru
      _
    // Predicated region
    $region74: #{tpu_custom_call.1} parent=1 // pred_check
      _
    $region75: #{tpu_custom_call.1} parent=1 // pred_check_branch
      %2273 = sbr.rel (0) target = $region77
    $region76: #{tpu_custom_call.1} parent=1 // pred_region
      %2274 = dma.done [#allocation5], 32
    $region77: #{tpu_custom_call.1} parent=1 // pred_fallthru
      _
    // Predicated region
    $region78: #{tpu_custom_call.1} parent=1 // pred_check
      _
    $region79: #{tpu_custom_call.1} parent=1 // pred_check_branch
      %2276 = sbr.rel (0) target = $region81
    $region80: #{tpu_custom_call.1} parent=1 // pred_region
      %2277 = dma.done [#allocation14], 32
    $region81: #{tpu_custom_call.1} parent=1 // pred_fallthru
      _
    %2278 = vsyncpa [#allocation4], 1
    %2279 = vsyncpa [#allocation7], 1
    %2280 = vsyncpa [#allocation10], 1
    %2281 = vsyncpa [#allocation5], 1
    %2282 = vsyncpa [#allocation14], 1

</llo_original>
